<compile_context>
chip_gen: v5e
topology: v5e:2x2
jax: 0.10.0
libtpu: 0.0.40
codegen_flags: <defaults>
</compile_context>

<pallas_src>
import jax
import jax.numpy as jnp
import numpy as np
from jax.experimental import pallas as pl
from jax.experimental.pallas import tpu as pltpu

# ----- configuration (matches ResidualCouplingLayer.__init__ args) -----------
CHANNELS = 4          # channels (must be even)
HALF = CHANNELS // 2  # half_channels
HIDDEN = 32           # hidden_channels (must be even)
KSIZE = 3             # kernel_size (odd)
DIL_RATE = 2          # dilation_rate
N_LAYERS = 3          # n_layers
T = 64                # sequence length
B = 2                 # batch
BT = B * T            # fused batch*time lane axis (=128 -> full vreg lanes)
MEAN_ONLY = False
# gin_channels = 0 -> g1/g2/g3 are None, conditioning terms are zeros.
# p_dropout  = 0  -> dropout is identity.


# ----------------------------- Pallas kernel ---------------------------------
def _rcl_kernel(x_ref, mask_ref,
                pre_w_ref, pre_b_ref,
                in_w_ref, in_b_ref,
                rs_w_ref, rs_b_ref,
                post_w_ref, post_b_ref,
                xout_ref, logdet_ref):
    f32 = jnp.float32

    # Channel-major working set: (C, B*T) with both batch elements side by side
    # on the lane axis.  1x1 convs become W(Cout,Cin) @ act(Cin, BT) matmuls.
    x_b0 = x_ref[0]                                             # (C, T)
    x_b1 = x_ref[1]                                             # (C, T)
    x0 = jnp.concatenate([x_b0[:HALF], x_b1[:HALF]], axis=1)    # (HALF, BT)
    x1 = jnp.concatenate([x_b0[HALF:], x_b1[HALF:]], axis=1)    # (HALF, BT)
    mask = jnp.concatenate([mask_ref[0], mask_ref[1]], axis=1)  # (1, BT)
    mask_h = jnp.broadcast_to(mask, (HIDDEN, BT))               # hoisted bcast

    # per-lane time index inside its batch segment (for dilated-conv padding /
    # batch-seam masking of the rolled taps)
    t_idx = jax.lax.broadcasted_iota(jnp.int32, (1, BT), 1)
    if (T & (T - 1)) == 0:
        t_in = jnp.bitwise_and(t_idx, T - 1)
    else:
        t_in = t_idx % T

    def tap(h, off):
        """h[:, t + off] within each batch segment, zero at segment edges."""
        if off == 0:
            return h
        rolled = pltpu.roll(h, shift=(-off) % BT, axis=1)        # XLU rotate
        ok = (t_in + off >= 0) & (t_in + off < T)
        return rolled * jnp.where(ok, 1.0, 0.0)

    # pre 1x1 conv (contraction dim = HALF = 2): VPU broadcast-FMA, not MXU.
    pre_w = pre_w_ref[...]                                       # (HIDDEN, HALF)
    h = pre_b_ref[...] + pre_w[:, 0:1] * x0[0:1, :]
    for c in range(1, HALF):
        h = h + pre_w[:, c:c + 1] * x0[c:c + 1, :]
    h = h * mask_h                                               # (HIDDEN, BT)

    # WN stack (g1=g2=g3=None -> conditioning is zero; dropout p=0 -> identity)
    output = jnp.zeros((HIDDEN, BT), f32)
    for i in range(N_LAYERS):
        d = DIL_RATE ** i
        # fused dilated conv: one (2H, K*H) @ (K*H, BT) matmul per layer
        h_stack = jnp.concatenate(
            [tap(h, d * (k - (KSIZE - 1) // 2)) for k in range(KSIZE)], axis=0)
        x_in = (jnp.dot(in_w_ref[i], h_stack, preferred_element_type=f32)
                + in_b_ref[i])                                   # (2H, BT)
        acts = jnp.tanh(x_in[:HIDDEN]) * jax.nn.sigmoid(x_in[HIDDEN:])
        rs = (jnp.dot(rs_w_ref[i], acts, preferred_element_type=f32)
              + rs_b_ref[i])                                     # (2H, BT)
        # Uniform res/skip handling: the last layer's weights were packed into
        # the skip half with zeros in the residual half, so this is exact.
        h = (h + rs[:HIDDEN]) * mask_h
        output = output + rs[HIDDEN:]

    enc = output * mask_h                                        # WN output

    # post 1x1 conv hidden -> 2*half, then mask
    stats = (jnp.dot(post_w_ref[...], enc, preferred_element_type=f32)
             + post_b_ref[...]) * mask                           # (2*HALF, BT)
    m = stats[:HALF]
    logs = stats[HALF:]

    # forward (reverse=False) affine coupling
    x1_new = m + x1 * jnp.exp(logs) * mask

    for b in range(B):
        lo = b * T
        xout_ref[b] = jnp.concatenate(
            [x0[:, lo:lo + T], x1_new[:, lo:lo + T]], axis=0)    # (C, T)
        logdet_ref[b] = jnp.sum(logs[:, lo:lo + T])


# ------------------------------- wrapper --------------------------------------
def residual_coupling_forward(x_bct, mask_b1t, kp):
    """x_bct: (B, CHANNELS, T), mask_b1t: (B, 1, T).  Returns ((B,C,T), (B,))."""

    def fixed(shape):
        zeros = (0,) * len(shape)
        return pl.BlockSpec(shape, lambda i, _z=zeros: _z)

    in_specs = [
        fixed((B, CHANNELS, T)),                                 # x
        fixed((B, 1, T)),                                        # mask
        fixed((HIDDEN, HALF)),                                   # pre_w
        fixed((HIDDEN, 1)),                                      # pre_b
        fixed((N_LAYERS, 2 * HIDDEN, KSIZE * HIDDEN)),           # in_w (fused taps)
        fixed((N_LAYERS, 2 * HIDDEN, 1)),                        # in_b
        fixed((N_LAYERS, 2 * HIDDEN, HIDDEN)),                   # rs_w (packed)
        fixed((N_LAYERS, 2 * HIDDEN, 1)),                        # rs_b (packed)
        fixed((2 * HALF, HIDDEN)),                               # post_w
        fixed((2 * HALF, 1)),                                    # post_b
    ]
    out_specs = (
        fixed((B, CHANNELS, T)),                                 # x out
        pl.BlockSpec((B,), lambda i: (0,),
                     memory_space=pltpu.MemorySpace.SMEM),       # logdet
    )
    out_shape = (
        jax.ShapeDtypeStruct((B, CHANNELS, T), jnp.float32),
        jax.ShapeDtypeStruct((B,), jnp.float32),
    )

    return pl.pallas_call(
        _rcl_kernel,
        grid=(1,),
        in_specs=in_specs,
        out_specs=out_specs,
        out_shape=out_shape,
        compiler_params=pltpu.CompilerParams(
            dimension_semantics=("arbitrary",)),
    )(x_bct, mask_b1t,
      kp["pre_w"], kp["pre_b"],
      kp["in_w"], kp["in_b"],
      kp["rs_w"], kp["rs_b"],
      kp["post_w"], kp["post_b"])


# ------------------------------ param init ------------------------------------
def init_params(key):
    ks = jax.random.split(key, 8)
    s = 0.1
    p = {}
    # pre: Conv1d(HALF -> HIDDEN, k=1): torch weight (HIDDEN, HALF, 1) -> (HIDDEN, HALF)
    p["pre_w"] = s * jax.random.normal(ks[0], (HIDDEN, HALF), jnp.float32)
    p["pre_b"] = s * jax.random.normal(ks[1], (HIDDEN, 1), jnp.float32)
    # WN in_layers: Conv1d(HIDDEN -> 2H, k=KSIZE, dilation d); per-tap (2H, H).
    # TODO(synk): weight_norm is folded — at init g*v/||v|| == v, so plain weights suffice.
    p["in_w"] = s * jax.random.normal(
        ks[2], (N_LAYERS, KSIZE, 2 * HIDDEN, HIDDEN), jnp.float32)
    p["in_b"] = s * jax.random.normal(ks[3], (N_LAYERS, 2 * HIDDEN, 1), jnp.float32)
    # res_skip layers: layers 0..L-2 map H -> 2H ([res; skip]); the last maps
    # H -> H (skip only), stored in the first H rows of rs_w[L-1].
    p["rs_w"] = s * jax.random.normal(
        ks[4], (N_LAYERS, 2 * HIDDEN, HIDDEN), jnp.float32)
    p["rs_b"] = s * jax.random.normal(ks[5], (N_LAYERS, 2 * HIDDEN, 1), jnp.float32)
    # post: the real module zero-inits these; random here so the affine
    # coupling / exp(logs) / logdet path is actually exercised by the test.
    p["post_w"] = s * jax.random.normal(
        ks[6], (HALF * (2 - int(MEAN_ONLY)), HIDDEN), jnp.float32)
    p["post_b"] = s * jax.random.normal(
        ks[7], (HALF * (2 - int(MEAN_ONLY)), 1), jnp.float32)
    return p


def pack_kernel_params(p):
    """One-time weight repacking into the kernel layout (done outside the hot path)."""
    kp = dict(p)
    # fuse the K conv taps: (L, K, 2H, H) -> (L, 2H, K*H)
    kp["in_w"] = jnp.transpose(p["in_w"], (0, 2, 1, 3)).reshape(
        N_LAYERS, 2 * HIDDEN, KSIZE * HIDDEN)
    # pack the last res_skip layer (H -> H) into the skip half, zero the res half
    last_w = p["rs_w"][N_LAYERS - 1, :HIDDEN]
    last_b = p["rs_b"][N_LAYERS - 1, :HIDDEN]
    kp["rs_w"] = p["rs_w"].at[N_LAYERS - 1].set(
        jnp.concatenate([jnp.zeros((HIDDEN, HIDDEN), jnp.float32), last_w], axis=0))
    kp["rs_b"] = p["rs_b"].at[N_LAYERS - 1].set(
        jnp.concatenate([jnp.zeros((HIDDEN, 1), jnp.float32), last_b], axis=0))
    return kp


# -------------------------- pure-JAX reference --------------------------------
def _tshift(x, off):
    """y[..., t] = x[..., t + off], zero padded (same-padded dilated conv tap)."""
    if off == 0:
        return x
    if off > 0:
        return jnp.concatenate([x[..., off:], jnp.zeros_like(x[..., :off])], axis=-1)
    return jnp.concatenate([jnp.zeros_like(x[..., off:]), x[..., :off]], axis=-1)


def ref_forward(x, x_mask, p):
    x0, x1 = x[:, :HALF], x[:, HALF:]
    h = (jnp.einsum("oc,bct->bot", p["pre_w"], x0) + p["pre_b"][None]) * x_mask
    output = jnp.zeros((x.shape[0], HIDDEN, x.shape[2]), jnp.float32)
    for i in range(N_LAYERS):
        d = DIL_RATE ** i
        acc = jnp.zeros((x.shape[0], 2 * HIDDEN, x.shape[2]), jnp.float32)
        for k in range(KSIZE):
            off = d * (k - (KSIZE - 1) // 2)
            acc = acc + jnp.einsum("oc,bct->bot", p["in_w"][i, k], _tshift(h, off))
        x_in = acc + p["in_b"][i][None]
        acts = jnp.tanh(x_in[:, :HIDDEN]) * jax.nn.sigmoid(x_in[:, HIDDEN:])
        if i < N_LAYERS - 1:
            rs = jnp.einsum("oc,bct->bot", p["rs_w"][i], acts) + p["rs_b"][i][None]
            h = (h + rs[:, :HIDDEN]) * x_mask
            output = output + rs[:, HIDDEN:]
        else:
            rs = (jnp.einsum("oc,bct->bot", p["rs_w"][i, :HIDDEN], acts)
                  + p["rs_b"][i, :HIDDEN][None])
            output = output + rs
    enc = output * x_mask
    stats = (jnp.einsum("oc,bct->bot", p["post_w"], enc) + p["post_b"][None]) * x_mask
    m, logs = stats[:, :HALF], stats[:, HALF:]
    x1n = m + x1 * jnp.exp(logs) * x_mask
    x_out = jnp.concatenate([x0, x1n], axis=1)
    logdet = jnp.sum(logs, axis=(1, 2))
    return x_out, logdet


# --------------------------------- main ----------------------------------------
if __name__ == "__main__":
    key = jax.random.PRNGKey(0)
    kx, kparam = jax.random.split(key)
    params = init_params(kparam)
    kernel_params = pack_kernel_params(params)

    x = jax.random.normal(kx, (B, CHANNELS, T), jnp.float32)
    # mask: first `len` frames valid per batch element
    lengths = jnp.array([T, T - 10], jnp.int32)
    t_idx = jnp.arange(T)[None, :]
    x_mask = (t_idx < lengths[:, None]).astype(jnp.float32)[:, None, :]   # (B,1,T)

    fwd = jax.jit(residual_coupling_forward)
    x_out, logdet = fwd(x, x_mask, kernel_params)
    jax.block_until_ready((x_out, logdet))

    x_ref, logdet_ref = ref_forward(x, x_mask, params)

    np.testing.assert_allclose(np.asarray(x_out), np.asarray(x_ref),
                               rtol=1e-4, atol=1e-4)
    np.testing.assert_allclose(np.asarray(logdet), np.asarray(logdet_ref),
                               rtol=1e-3, atol=1e-3)
    print("KERNEL_OK")
</pallas_src>

<mosaic_0001>
module attributes {stable_mosaic.version = 11 : i64} {
  func.func @_rcl_kernel(%arg0: i32, %arg1: memref<2x4x64xf32, #tpu.memory_space<vmem>>, %arg2: memref<2x1x64xf32, #tpu.memory_space<vmem>>, %arg3: memref<32x2xf32, #tpu.memory_space<vmem>>, %arg4: memref<32x1xf32, #tpu.memory_space<vmem>>, %arg5: memref<3x64x96xf32, #tpu.memory_space<vmem>>, %arg6: memref<3x64x1xf32, #tpu.memory_space<vmem>>, %arg7: memref<3x64x32xf32, #tpu.memory_space<vmem>>, %arg8: memref<3x64x1xf32, #tpu.memory_space<vmem>>, %arg9: memref<4x32xf32, #tpu.memory_space<vmem>>, %arg10: memref<4x1xf32, #tpu.memory_space<vmem>>, %arg11: memref<2x4x64xf32, #tpu.memory_space<vmem>>, %arg12: memref<2xf32, #tpu.memory_space<smem>>) attributes {dimension_semantics = [#tpu.dimension_semantics<arbitrary>], iteration_bounds = array<i64: 1>, scalar_prefetch = 0 : i64, scratch_operands = 0 : i64, tpu.core_type = #tpu.core_type<tc>, window_params = [{pipeline_mode = #tpu.pipeline_mode<synchronous>, transform_indices = @transform_0, window_bounds = array<i64: 2, 4, 64>}, {pipeline_mode = #tpu.pipeline_mode<synchronous>, transform_indices = @transform_1, window_bounds = array<i64: 2, 1, 64>}, {pipeline_mode = #tpu.pipeline_mode<synchronous>, transform_indices = @transform_2, window_bounds = array<i64: 32, 2>}, {pipeline_mode = #tpu.pipeline_mode<synchronous>, transform_indices = @transform_3, window_bounds = array<i64: 32, 1>}, {pipeline_mode = #tpu.pipeline_mode<synchronous>, transform_indices = @transform_4, window_bounds = array<i64: 3, 64, 96>}, {pipeline_mode = #tpu.pipeline_mode<synchronous>, transform_indices = @transform_5, window_bounds = array<i64: 3, 64, 1>}, {pipeline_mode = #tpu.pipeline_mode<synchronous>, transform_indices = @transform_6, window_bounds = array<i64: 3, 64, 32>}, {pipeline_mode = #tpu.pipeline_mode<synchronous>, transform_indices = @transform_7, window_bounds = array<i64: 3, 64, 1>}, {pipeline_mode = #tpu.pipeline_mode<synchronous>, transform_indices = @transform_8, window_bounds = array<i64: 4, 32>}, {pipeline_mode = #tpu.pipeline_mode<synchronous>, transform_indices = @transform_9, window_bounds = array<i64: 4, 1>}, {pipeline_mode = #tpu.pipeline_mode<synchronous>, transform_indices = @transform_10, window_bounds = array<i64: 2, 4, 64>}, {transform_indices = @transform_11, window_bounds = array<i64: 2>}]} {
    %c0 = arith.constant 0 : index
    %c0_0 = arith.constant 0 : index
    %c0_1 = arith.constant 0 : index
    %0 = vector.load %arg1[%c0, %c0_0, %c0_1] : memref<2x4x64xf32, #tpu.memory_space<vmem>>, vector<1x4x64xf32>
    %1 = vector.shape_cast %0 : vector<1x4x64xf32> to vector<4x64xf32>
    %c1 = arith.constant 1 : index
    %c0_2 = arith.constant 0 : index
    %c0_3 = arith.constant 0 : index
    %2 = vector.load %arg1[%c1, %c0_2, %c0_3] : memref<2x4x64xf32, #tpu.memory_space<vmem>>, vector<1x4x64xf32>
    %3 = vector.shape_cast %2 : vector<1x4x64xf32> to vector<4x64xf32>
    %4 = vector.extract_strided_slice %1 {offsets = [0, 0], sizes = [2, 64], strides = [1, 1]} : vector<4x64xf32> to vector<2x64xf32>
    %5 = vector.extract_strided_slice %3 {offsets = [0, 0], sizes = [2, 64], strides = [1, 1]} : vector<4x64xf32> to vector<2x64xf32>
    %6 = tpu.concatenate %4, %5 in 1 : vector<2x64xf32>, vector<2x64xf32> -> vector<2x128xf32>
    %7 = vector.extract_strided_slice %1 {offsets = [2, 0], sizes = [2, 64], strides = [1, 1]} : vector<4x64xf32> to vector<2x64xf32>
    %8 = vector.extract_strided_slice %3 {offsets = [2, 0], sizes = [2, 64], strides = [1, 1]} : vector<4x64xf32> to vector<2x64xf32>
    %9 = tpu.concatenate %7, %8 in 1 : vector<2x64xf32>, vector<2x64xf32> -> vector<2x128xf32>
    %c0_4 = arith.constant 0 : index
    %c0_5 = arith.constant 0 : index
    %c0_6 = arith.constant 0 : index
    %10 = vector.load %arg2[%c0_4, %c0_5, %c0_6] : memref<2x1x64xf32, #tpu.memory_space<vmem>>, vector<1x1x64xf32>
    %11 = vector.shape_cast %10 : vector<1x1x64xf32> to vector<1x64xf32>
    %c1_7 = arith.constant 1 : index
    %c0_8 = arith.constant 0 : index
    %c0_9 = arith.constant 0 : index
    %12 = vector.load %arg2[%c1_7, %c0_8, %c0_9] : memref<2x1x64xf32, #tpu.memory_space<vmem>>, vector<1x1x64xf32>
    %13 = vector.shape_cast %12 : vector<1x1x64xf32> to vector<1x64xf32>
    %14 = tpu.concatenate %11, %13 in 1 : vector<1x64xf32>, vector<1x64xf32> -> vector<1x128xf32>
    %15 = vector.shape_cast %14 : vector<1x128xf32> to vector<1x128xf32>
    %16 = vector.broadcast %15 : vector<1x128xf32> to vector<32x128xf32>
    %17 = tpu.iota {dimensions = array<i32: 1>} : vector<1x128xi32>
    %c63_i32 = arith.constant 63 : i32
    %18 = vector.broadcast %c63_i32 : i32 to vector<1x128xi32>
    %19 = arith.andi %17, %18 : vector<1x128xi32>
    %c0_10 = arith.constant 0 : index
    %c0_11 = arith.constant 0 : index
    %20 = vector.load %arg3[%c0_10, %c0_11] : memref<32x2xf32, #tpu.memory_space<vmem>>, vector<32x2xf32>
    %c0_12 = arith.constant 0 : index
    %c0_13 = arith.constant 0 : index
    %21 = vector.load %arg4[%c0_12, %c0_13] : memref<32x1xf32, #tpu.memory_space<vmem>>, vector<32x1xf32>
    %22 = vector.extract_strided_slice %20 {offsets = [0, 0], sizes = [32, 1], strides = [1, 1]} : vector<32x2xf32> to vector<32x1xf32>
    %23 = vector.extract_strided_slice %6 {offsets = [0, 0], sizes = [1, 128], strides = [1, 1]} : vector<2x128xf32> to vector<1x128xf32>
    %24 = vector.broadcast %22 : vector<32x1xf32> to vector<32x128xf32>
    %25 = vector.broadcast %23 : vector<1x128xf32> to vector<32x128xf32>
    %26 = arith.mulf %24, %25 : vector<32x128xf32>
    %27 = vector.broadcast %21 : vector<32x1xf32> to vector<32x128xf32>
    %28 = arith.addf %27, %26 : vector<32x128xf32>
    %29 = vector.extract_strided_slice %20 {offsets = [0, 1], sizes = [32, 1], strides = [1, 1]} : vector<32x2xf32> to vector<32x1xf32>
    %30 = vector.extract_strided_slice %6 {offsets = [1, 0], sizes = [1, 128], strides = [1, 1]} : vector<2x128xf32> to vector<1x128xf32>
    %31 = vector.broadcast %29 : vector<32x1xf32> to vector<32x128xf32>
    %32 = vector.broadcast %30 : vector<1x128xf32> to vector<32x128xf32>
    %33 = arith.mulf %31, %32 : vector<32x128xf32>
    %34 = arith.addf %28, %33 : vector<32x128xf32>
    %35 = arith.mulf %34, %16 : vector<32x128xf32>
    %cst = arith.constant 0.000000e+00 : f32
    %36 = vector.broadcast %cst : f32 to vector<32x128xf32>
    %c1_i32 = arith.constant 1 : i32
    %37 = tpu.dynamic_rotate %35 by %c1_i32 dim 1 : vector<32x128xf32>, i32 -> vector<32x128xf32>
    %c-1_i32 = arith.constant -1 : i32
    %38 = vector.broadcast %c-1_i32 : i32 to vector<1x128xi32>
    %39 = arith.addi %19, %38 : vector<1x128xi32>
    %c0_i32 = arith.constant 0 : i32
    %40 = vector.broadcast %c0_i32 : i32 to vector<1x128xi32>
    %41 = arith.cmpi sge, %39, %40 : vector<1x128xi32>
    %c-1_i32_14 = arith.constant -1 : i32
    %42 = vector.broadcast %c-1_i32_14 : i32 to vector<1x128xi32>
    %43 = arith.addi %19, %42 : vector<1x128xi32>
    %c64_i32 = arith.constant 64 : i32
    %44 = vector.broadcast %c64_i32 : i32 to vector<1x128xi32>
    %45 = arith.cmpi slt, %43, %44 : vector<1x128xi32>
    %46 = arith.andi %41, %45 : vector<1x128xi1>
    %cst_15 = arith.constant 1.000000e+00 : f32
    %cst_16 = arith.constant 0.000000e+00 : f32
    %47 = vector.broadcast %cst_15 : f32 to vector<1x128xf32>
    %48 = vector.broadcast %cst_16 : f32 to vector<1x128xf32>
    %49 = arith.select %46, %47, %48 : vector<1x128xi1>, vector<1x128xf32>
    %50 = vector.broadcast %49 : vector<1x128xf32> to vector<32x128xf32>
    %51 = arith.mulf %37, %50 : vector<32x128xf32>
    %c127_i32 = arith.constant 127 : i32
    %52 = tpu.dynamic_rotate %35 by %c127_i32 dim 1 : vector<32x128xf32>, i32 -> vector<32x128xf32>
    %c1_i32_17 = arith.constant 1 : i32
    %53 = vector.broadcast %c1_i32_17 : i32 to vector<1x128xi32>
    %54 = arith.addi %19, %53 : vector<1x128xi32>
    %c0_i32_18 = arith.constant 0 : i32
    %55 = vector.broadcast %c0_i32_18 : i32 to vector<1x128xi32>
    %56 = arith.cmpi sge, %54, %55 : vector<1x128xi32>
    %c1_i32_19 = arith.constant 1 : i32
    %57 = vector.broadcast %c1_i32_19 : i32 to vector<1x128xi32>
    %58 = arith.addi %19, %57 : vector<1x128xi32>
    %c64_i32_20 = arith.constant 64 : i32
    %59 = vector.broadcast %c64_i32_20 : i32 to vector<1x128xi32>
    %60 = arith.cmpi slt, %58, %59 : vector<1x128xi32>
    %61 = arith.andi %56, %60 : vector<1x128xi1>
    %cst_21 = arith.constant 1.000000e+00 : f32
    %cst_22 = arith.constant 0.000000e+00 : f32
    %62 = vector.broadcast %cst_21 : f32 to vector<1x128xf32>
    %63 = vector.broadcast %cst_22 : f32 to vector<1x128xf32>
    %64 = arith.select %61, %62, %63 : vector<1x128xi1>, vector<1x128xf32>
    %65 = vector.broadcast %64 : vector<1x128xf32> to vector<32x128xf32>
    %66 = arith.mulf %52, %65 : vector<32x128xf32>
    %67 = tpu.concatenate %51, %35, %66 in 0 : vector<32x128xf32>, vector<32x128xf32>, vector<32x128xf32> -> vector<96x128xf32>
    %c0_23 = arith.constant 0 : index
    %c0_24 = arith.constant 0 : index
    %c0_25 = arith.constant 0 : index
    %68 = vector.load %arg5[%c0_23, %c0_24, %c0_25] : memref<3x64x96xf32, #tpu.memory_space<vmem>>, vector<1x64x96xf32>
    %69 = vector.shape_cast %68 : vector<1x64x96xf32> to vector<64x96xf32>
    %cst_26 = arith.constant dense<0.000000e+00> : vector<64x128xf32>
    %70 = tpu.matmul %69, %67, %cst_26 {dimension_numbers = #tpu.dot_dimension_numbers<[1], [0], [0], [1], [0, 0, 1, 1], [], []>} : vector<64x96xf32>, vector<96x128xf32>, vector<64x128xf32> -> vector<64x128xf32>
    %c0_27 = arith.constant 0 : index
    %c0_28 = arith.constant 0 : index
    %c0_29 = arith.constant 0 : index
    %71 = vector.load %arg6[%c0_27, %c0_28, %c0_29] : memref<3x64x1xf32, #tpu.memory_space<vmem>>, vector<1x64x1xf32>
    %72 = vector.shape_cast %71 : vector<1x64x1xf32> to vector<64x1xf32>
    %73 = vector.broadcast %72 : vector<64x1xf32> to vector<64x128xf32>
    %74 = arith.addf %70, %73 : vector<64x128xf32>
    %75 = vector.extract_strided_slice %74 {offsets = [0, 0], sizes = [32, 128], strides = [1, 1]} : vector<64x128xf32> to vector<32x128xf32>
    %76 = math.tanh %75 : vector<32x128xf32>
    %77 = vector.extract_strided_slice %74 {offsets = [32, 0], sizes = [32, 128], strides = [1, 1]} : vector<64x128xf32> to vector<32x128xf32>
    %78 = arith.negf %77 : vector<32x128xf32>
    %79 = math.exp %78 : vector<32x128xf32>
    %cst_30 = arith.constant 1.000000e+00 : f32
    %80 = vector.broadcast %cst_30 : f32 to vector<32x128xf32>
    %81 = arith.addf %80, %79 : vector<32x128xf32>
    %82 = arith.divf %80, %81 : vector<32x128xf32>
    %83 = arith.mulf %76, %82 : vector<32x128xf32>
    %c0_31 = arith.constant 0 : index
    %c0_32 = arith.constant 0 : index
    %c0_33 = arith.constant 0 : index
    %84 = vector.load %arg7[%c0_31, %c0_32, %c0_33] : memref<3x64x32xf32, #tpu.memory_space<vmem>>, vector<1x64x32xf32>
    %85 = vector.shape_cast %84 : vector<1x64x32xf32> to vector<64x32xf32>
    %cst_34 = arith.constant dense<0.000000e+00> : vector<64x128xf32>
    %86 = tpu.matmul %85, %83, %cst_34 {dimension_numbers = #tpu.dot_dimension_numbers<[1], [0], [0], [1], [0, 0, 1, 1], [], []>} : vector<64x32xf32>, vector<32x128xf32>, vector<64x128xf32> -> vector<64x128xf32>
    %c0_35 = arith.constant 0 : index
    %c0_36 = arith.constant 0 : index
    %c0_37 = arith.constant 0 : index
    %87 = vector.load %arg8[%c0_35, %c0_36, %c0_37] : memref<3x64x1xf32, #tpu.memory_space<vmem>>, vector<1x64x1xf32>
    %88 = vector.shape_cast %87 : vector<1x64x1xf32> to vector<64x1xf32>
    %89 = vector.broadcast %88 : vector<64x1xf32> to vector<64x128xf32>
    %90 = arith.addf %86, %89 : vector<64x128xf32>
    %91 = vector.extract_strided_slice %90 {offsets = [0, 0], sizes = [32, 128], strides = [1, 1]} : vector<64x128xf32> to vector<32x128xf32>
    %92 = arith.addf %35, %91 : vector<32x128xf32>
    %93 = arith.mulf %92, %16 : vector<32x128xf32>
    %94 = vector.extract_strided_slice %90 {offsets = [32, 0], sizes = [32, 128], strides = [1, 1]} : vector<64x128xf32> to vector<32x128xf32>
    %95 = arith.addf %36, %94 : vector<32x128xf32>
    %c2_i32 = arith.constant 2 : i32
    %96 = tpu.dynamic_rotate %93 by %c2_i32 dim 1 : vector<32x128xf32>, i32 -> vector<32x128xf32>
    %c-2_i32 = arith.constant -2 : i32
    %97 = vector.broadcast %c-2_i32 : i32 to vector<1x128xi32>
    %98 = arith.addi %19, %97 : vector<1x128xi32>
    %c0_i32_38 = arith.constant 0 : i32
    %99 = vector.broadcast %c0_i32_38 : i32 to vector<1x128xi32>
    %100 = arith.cmpi sge, %98, %99 : vector<1x128xi32>
    %c-2_i32_39 = arith.constant -2 : i32
    %101 = vector.broadcast %c-2_i32_39 : i32 to vector<1x128xi32>
    %102 = arith.addi %19, %101 : vector<1x128xi32>
    %c64_i32_40 = arith.constant 64 : i32
    %103 = vector.broadcast %c64_i32_40 : i32 to vector<1x128xi32>
    %104 = arith.cmpi slt, %102, %103 : vector<1x128xi32>
    %105 = arith.andi %100, %104 : vector<1x128xi1>
    %cst_41 = arith.constant 1.000000e+00 : f32
    %cst_42 = arith.constant 0.000000e+00 : f32
    %106 = vector.broadcast %cst_41 : f32 to vector<1x128xf32>
    %107 = vector.broadcast %cst_42 : f32 to vector<1x128xf32>
    %108 = arith.select %105, %106, %107 : vector<1x128xi1>, vector<1x128xf32>
    %109 = vector.broadcast %108 : vector<1x128xf32> to vector<32x128xf32>
    %110 = arith.mulf %96, %109 : vector<32x128xf32>
    %c126_i32 = arith.constant 126 : i32
    %111 = tpu.dynamic_rotate %93 by %c126_i32 dim 1 : vector<32x128xf32>, i32 -> vector<32x128xf32>
    %c2_i32_43 = arith.constant 2 : i32
    %112 = vector.broadcast %c2_i32_43 : i32 to vector<1x128xi32>
    %113 = arith.addi %19, %112 : vector<1x128xi32>
    %c0_i32_44 = arith.constant 0 : i32
    %114 = vector.broadcast %c0_i32_44 : i32 to vector<1x128xi32>
    %115 = arith.cmpi sge, %113, %114 : vector<1x128xi32>
    %c2_i32_45 = arith.constant 2 : i32
    %116 = vector.broadcast %c2_i32_45 : i32 to vector<1x128xi32>
    %117 = arith.addi %19, %116 : vector<1x128xi32>
    %c64_i32_46 = arith.constant 64 : i32
    %118 = vector.broadcast %c64_i32_46 : i32 to vector<1x128xi32>
    %119 = arith.cmpi slt, %117, %118 : vector<1x128xi32>
    %120 = arith.andi %115, %119 : vector<1x128xi1>
    %cst_47 = arith.constant 1.000000e+00 : f32
    %cst_48 = arith.constant 0.000000e+00 : f32
    %121 = vector.broadcast %cst_47 : f32 to vector<1x128xf32>
    %122 = vector.broadcast %cst_48 : f32 to vector<1x128xf32>
    %123 = arith.select %120, %121, %122 : vector<1x128xi1>, vector<1x128xf32>
    %124 = vector.broadcast %123 : vector<1x128xf32> to vector<32x128xf32>
    %125 = arith.mulf %111, %124 : vector<32x128xf32>
    %126 = tpu.concatenate %110, %93, %125 in 0 : vector<32x128xf32>, vector<32x128xf32>, vector<32x128xf32> -> vector<96x128xf32>
    %c1_49 = arith.constant 1 : index
    %c0_50 = arith.constant 0 : index
    %c0_51 = arith.constant 0 : index
    %127 = vector.load %arg5[%c1_49, %c0_50, %c0_51] : memref<3x64x96xf32, #tpu.memory_space<vmem>>, vector<1x64x96xf32>
    %128 = vector.shape_cast %127 : vector<1x64x96xf32> to vector<64x96xf32>
    %cst_52 = arith.constant dense<0.000000e+00> : vector<64x128xf32>
    %129 = tpu.matmul %128, %126, %cst_52 {dimension_numbers = #tpu.dot_dimension_numbers<[1], [0], [0], [1], [0, 0, 1, 1], [], []>} : vector<64x96xf32>, vector<96x128xf32>, vector<64x128xf32> -> vector<64x128xf32>
    %c1_53 = arith.constant 1 : index
    %c0_54 = arith.constant 0 : index
    %c0_55 = arith.constant 0 : index
    %130 = vector.load %arg6[%c1_53, %c0_54, %c0_55] : memref<3x64x1xf32, #tpu.memory_space<vmem>>, vector<1x64x1xf32>
    %131 = vector.shape_cast %130 : vector<1x64x1xf32> to vector<64x1xf32>
    %132 = vector.broadcast %131 : vector<64x1xf32> to vector<64x128xf32>
    %133 = arith.addf %129, %132 : vector<64x128xf32>
    %134 = vector.extract_strided_slice %133 {offsets = [0, 0], sizes = [32, 128], strides = [1, 1]} : vector<64x128xf32> to vector<32x128xf32>
    %135 = math.tanh %134 : vector<32x128xf32>
    %136 = vector.extract_strided_slice %133 {offsets = [32, 0], sizes = [32, 128], strides = [1, 1]} : vector<64x128xf32> to vector<32x128xf32>
    %137 = arith.negf %136 : vector<32x128xf32>
    %138 = math.exp %137 : vector<32x128xf32>
    %cst_56 = arith.constant 1.000000e+00 : f32
    %139 = vector.broadcast %cst_56 : f32 to vector<32x128xf32>
    %140 = arith.addf %139, %138 : vector<32x128xf32>
    %141 = arith.divf %139, %140 : vector<32x128xf32>
    %142 = arith.mulf %135, %141 : vector<32x128xf32>
    %c1_57 = arith.constant 1 : index
    %c0_58 = arith.constant 0 : index
    %c0_59 = arith.constant 0 : index
    %143 = vector.load %arg7[%c1_57, %c0_58, %c0_59] : memref<3x64x32xf32, #tpu.memory_space<vmem>>, vector<1x64x32xf32>
    %144 = vector.shape_cast %143 : vector<1x64x32xf32> to vector<64x32xf32>
    %cst_60 = arith.constant dense<0.000000e+00> : vector<64x128xf32>
    %145 = tpu.matmul %144, %142, %cst_60 {dimension_numbers = #tpu.dot_dimension_numbers<[1], [0], [0], [1], [0, 0, 1, 1], [], []>} : vector<64x32xf32>, vector<32x128xf32>, vector<64x128xf32> -> vector<64x128xf32>
    %c1_61 = arith.constant 1 : index
    %c0_62 = arith.constant 0 : index
    %c0_63 = arith.constant 0 : index
    %146 = vector.load %arg8[%c1_61, %c0_62, %c0_63] : memref<3x64x1xf32, #tpu.memory_space<vmem>>, vector<1x64x1xf32>
    %147 = vector.shape_cast %146 : vector<1x64x1xf32> to vector<64x1xf32>
    %148 = vector.broadcast %147 : vector<64x1xf32> to vector<64x128xf32>
    %149 = arith.addf %145, %148 : vector<64x128xf32>
    %150 = vector.extract_strided_slice %149 {offsets = [0, 0], sizes = [32, 128], strides = [1, 1]} : vector<64x128xf32> to vector<32x128xf32>
    %151 = arith.addf %93, %150 : vector<32x128xf32>
    %152 = arith.mulf %151, %16 : vector<32x128xf32>
    %153 = vector.extract_strided_slice %149 {offsets = [32, 0], sizes = [32, 128], strides = [1, 1]} : vector<64x128xf32> to vector<32x128xf32>
    %154 = arith.addf %95, %153 : vector<32x128xf32>
    %c4_i32 = arith.constant 4 : i32
    %155 = tpu.dynamic_rotate %152 by %c4_i32 dim 1 : vector<32x128xf32>, i32 -> vector<32x128xf32>
    %c-4_i32 = arith.constant -4 : i32
    %156 = vector.broadcast %c-4_i32 : i32 to vector<1x128xi32>
    %157 = arith.addi %19, %156 : vector<1x128xi32>
    %c0_i32_64 = arith.constant 0 : i32
    %158 = vector.broadcast %c0_i32_64 : i32 to vector<1x128xi32>
    %159 = arith.cmpi sge, %157, %158 : vector<1x128xi32>
    %c-4_i32_65 = arith.constant -4 : i32
    %160 = vector.broadcast %c-4_i32_65 : i32 to vector<1x128xi32>
    %161 = arith.addi %19, %160 : vector<1x128xi32>
    %c64_i32_66 = arith.constant 64 : i32
    %162 = vector.broadcast %c64_i32_66 : i32 to vector<1x128xi32>
    %163 = arith.cmpi slt, %161, %162 : vector<1x128xi32>
    %164 = arith.andi %159, %163 : vector<1x128xi1>
    %cst_67 = arith.constant 1.000000e+00 : f32
    %cst_68 = arith.constant 0.000000e+00 : f32
    %165 = vector.broadcast %cst_67 : f32 to vector<1x128xf32>
    %166 = vector.broadcast %cst_68 : f32 to vector<1x128xf32>
    %167 = arith.select %164, %165, %166 : vector<1x128xi1>, vector<1x128xf32>
    %168 = vector.broadcast %167 : vector<1x128xf32> to vector<32x128xf32>
    %169 = arith.mulf %155, %168 : vector<32x128xf32>
    %c124_i32 = arith.constant 124 : i32
    %170 = tpu.dynamic_rotate %152 by %c124_i32 dim 1 : vector<32x128xf32>, i32 -> vector<32x128xf32>
    %c4_i32_69 = arith.constant 4 : i32
    %171 = vector.broadcast %c4_i32_69 : i32 to vector<1x128xi32>
    %172 = arith.addi %19, %171 : vector<1x128xi32>
    %c0_i32_70 = arith.constant 0 : i32
    %173 = vector.broadcast %c0_i32_70 : i32 to vector<1x128xi32>
    %174 = arith.cmpi sge, %172, %173 : vector<1x128xi32>
    %c4_i32_71 = arith.constant 4 : i32
    %175 = vector.broadcast %c4_i32_71 : i32 to vector<1x128xi32>
    %176 = arith.addi %19, %175 : vector<1x128xi32>
    %c64_i32_72 = arith.constant 64 : i32
    %177 = vector.broadcast %c64_i32_72 : i32 to vector<1x128xi32>
    %178 = arith.cmpi slt, %176, %177 : vector<1x128xi32>
    %179 = arith.andi %174, %178 : vector<1x128xi1>
    %cst_73 = arith.constant 1.000000e+00 : f32
    %cst_74 = arith.constant 0.000000e+00 : f32
    %180 = vector.broadcast %cst_73 : f32 to vector<1x128xf32>
    %181 = vector.broadcast %cst_74 : f32 to vector<1x128xf32>
    %182 = arith.select %179, %180, %181 : vector<1x128xi1>, vector<1x128xf32>
    %183 = vector.broadcast %182 : vector<1x128xf32> to vector<32x128xf32>
    %184 = arith.mulf %170, %183 : vector<32x128xf32>
    %185 = tpu.concatenate %169, %152, %184 in 0 : vector<32x128xf32>, vector<32x128xf32>, vector<32x128xf32> -> vector<96x128xf32>
    %c2 = arith.constant 2 : index
    %c0_75 = arith.constant 0 : index
    %c0_76 = arith.constant 0 : index
    %186 = vector.load %arg5[%c2, %c0_75, %c0_76] : memref<3x64x96xf32, #tpu.memory_space<vmem>>, vector<1x64x96xf32>
    %187 = vector.shape_cast %186 : vector<1x64x96xf32> to vector<64x96xf32>
    %cst_77 = arith.constant dense<0.000000e+00> : vector<64x128xf32>
    %188 = tpu.matmul %187, %185, %cst_77 {dimension_numbers = #tpu.dot_dimension_numbers<[1], [0], [0], [1], [0, 0, 1, 1], [], []>} : vector<64x96xf32>, vector<96x128xf32>, vector<64x128xf32> -> vector<64x128xf32>
    %c2_78 = arith.constant 2 : index
    %c0_79 = arith.constant 0 : index
    %c0_80 = arith.constant 0 : index
    %189 = vector.load %arg6[%c2_78, %c0_79, %c0_80] : memref<3x64x1xf32, #tpu.memory_space<vmem>>, vector<1x64x1xf32>
    %190 = vector.shape_cast %189 : vector<1x64x1xf32> to vector<64x1xf32>
    %191 = vector.broadcast %190 : vector<64x1xf32> to vector<64x128xf32>
    %192 = arith.addf %188, %191 : vector<64x128xf32>
    %193 = vector.extract_strided_slice %192 {offsets = [0, 0], sizes = [32, 128], strides = [1, 1]} : vector<64x128xf32> to vector<32x128xf32>
    %194 = math.tanh %193 : vector<32x128xf32>
    %195 = vector.extract_strided_slice %192 {offsets = [32, 0], sizes = [32, 128], strides = [1, 1]} : vector<64x128xf32> to vector<32x128xf32>
    %196 = arith.negf %195 : vector<32x128xf32>
    %197 = math.exp %196 : vector<32x128xf32>
    %cst_81 = arith.constant 1.000000e+00 : f32
    %198 = vector.broadcast %cst_81 : f32 to vector<32x128xf32>
    %199 = arith.addf %198, %197 : vector<32x128xf32>
    %200 = arith.divf %198, %199 : vector<32x128xf32>
    %201 = arith.mulf %194, %200 : vector<32x128xf32>
    %c2_82 = arith.constant 2 : index
    %c0_83 = arith.constant 0 : index
    %c0_84 = arith.constant 0 : index
    %202 = vector.load %arg7[%c2_82, %c0_83, %c0_84] : memref<3x64x32xf32, #tpu.memory_space<vmem>>, vector<1x64x32xf32>
    %203 = vector.shape_cast %202 : vector<1x64x32xf32> to vector<64x32xf32>
    %cst_85 = arith.constant dense<0.000000e+00> : vector<64x128xf32>
    %204 = tpu.matmul %203, %201, %cst_85 {dimension_numbers = #tpu.dot_dimension_numbers<[1], [0], [0], [1], [0, 0, 1, 1], [], []>} : vector<64x32xf32>, vector<32x128xf32>, vector<64x128xf32> -> vector<64x128xf32>
    %c2_86 = arith.constant 2 : index
    %c0_87 = arith.constant 0 : index
    %c0_88 = arith.constant 0 : index
    %205 = vector.load %arg8[%c2_86, %c0_87, %c0_88] : memref<3x64x1xf32, #tpu.memory_space<vmem>>, vector<1x64x1xf32>
    %206 = vector.shape_cast %205 : vector<1x64x1xf32> to vector<64x1xf32>
    %207 = vector.broadcast %206 : vector<64x1xf32> to vector<64x128xf32>
    %208 = arith.addf %204, %207 : vector<64x128xf32>
    %209 = vector.extract_strided_slice %208 {offsets = [32, 0], sizes = [32, 128], strides = [1, 1]} : vector<64x128xf32> to vector<32x128xf32>
    %210 = arith.addf %154, %209 : vector<32x128xf32>
    %211 = arith.mulf %210, %16 : vector<32x128xf32>
    %c0_89 = arith.constant 0 : index
    %c0_90 = arith.constant 0 : index
    %212 = vector.load %arg9[%c0_89, %c0_90] : memref<4x32xf32, #tpu.memory_space<vmem>>, vector<4x32xf32>
    %cst_91 = arith.constant dense<0.000000e+00> : vector<4x128xf32>
    %213 = tpu.matmul %212, %211, %cst_91 {dimension_numbers = #tpu.dot_dimension_numbers<[1], [0], [0], [1], [0, 0, 1, 1], [], []>} : vector<4x32xf32>, vector<32x128xf32>, vector<4x128xf32> -> vector<4x128xf32>
    %c0_92 = arith.constant 0 : index
    %c0_93 = arith.constant 0 : index
    %214 = vector.load %arg10[%c0_92, %c0_93] : memref<4x1xf32, #tpu.memory_space<vmem>>, vector<4x1xf32>
    %215 = vector.broadcast %214 : vector<4x1xf32> to vector<4x128xf32>
    %216 = arith.addf %213, %215 : vector<4x128xf32>
    %217 = vector.broadcast %14 : vector<1x128xf32> to vector<4x128xf32>
    %218 = arith.mulf %216, %217 : vector<4x128xf32>
    %219 = vector.extract_strided_slice %218 {offsets = [0, 0], sizes = [2, 128], strides = [1, 1]} : vector<4x128xf32> to vector<2x128xf32>
    %220 = vector.extract_strided_slice %218 {offsets = [2, 0], sizes = [2, 128], strides = [1, 1]} : vector<4x128xf32> to vector<2x128xf32>
    %221 = math.exp %220 : vector<2x128xf32>
    %222 = arith.mulf %9, %221 : vector<2x128xf32>
    %223 = vector.broadcast %14 : vector<1x128xf32> to vector<2x128xf32>
    %224 = arith.mulf %222, %223 : vector<2x128xf32>
    %225 = arith.addf %219, %224 : vector<2x128xf32>
    %226 = vector.extract_strided_slice %6 {offsets = [0, 0], sizes = [2, 64], strides = [1, 1]} : vector<2x128xf32> to vector<2x64xf32>
    %227 = vector.extract_strided_slice %225 {offsets = [0, 0], sizes = [2, 64], strides = [1, 1]} : vector<2x128xf32> to vector<2x64xf32>
    %228 = tpu.concatenate %226, %227 in 0 : vector<2x64xf32>, vector<2x64xf32> -> vector<4x64xf32>
    %c0_94 = arith.constant 0 : index
    %c0_95 = arith.constant 0 : index
    %c0_96 = arith.constant 0 : index
    %229 = vector.load %arg11[%c0_94, %c0_95, %c0_96] : memref<2x4x64xf32, #tpu.memory_space<vmem>>, vector<1x4x64xf32>
    %230 = vector.shape_cast %229 : vector<1x4x64xf32> to vector<4x64xf32>
    %231 = vector.shape_cast %228 : vector<4x64xf32> to vector<1x4x64xf32>
    tpu.vector_store %arg11[%c0_94, %c0_95, %c0_96], %231 {strides = array<i32>} : memref<2x4x64xf32, #tpu.memory_space<vmem>>, vector<1x4x64xf32>,
    %232 = vector.extract_strided_slice %220 {offsets = [0, 0], sizes = [2, 64], strides = [1, 1]} : vector<2x128xf32> to vector<2x64xf32>
    %233 = vector.shape_cast %232 : vector<2x64xf32> to vector<1x2x64xf32>
    %cst_97 = arith.constant dense<0.000000e+00> : vector<1xf32>
    %234 = vector.multi_reduction <add>, %233, %cst_97 [1, 2] : vector<1x2x64xf32> to vector<1xf32>
    %235 = vector.shape_cast %234 : vector<1xf32> to vector<1x1x1xf32>
    %236 = vector.extract %235[0, 0, 0] : f32 from vector<1x1x1xf32>
    %c0_98 = arith.constant 0 : index
    %237 = memref.load %arg12[%c0_98] : memref<2xf32, #tpu.memory_space<smem>>
    memref.store %236, %arg12[%c0_98] : memref<2xf32, #tpu.memory_space<smem>>
    %238 = vector.extract_strided_slice %6 {offsets = [0, 64], sizes = [2, 64], strides = [1, 1]} : vector<2x128xf32> to vector<2x64xf32>
    %239 = vector.extract_strided_slice %225 {offsets = [0, 64], sizes = [2, 64], strides = [1, 1]} : vector<2x128xf32> to vector<2x64xf32>
    %240 = tpu.concatenate %238, %239 in 0 : vector<2x64xf32>, vector<2x64xf32> -> vector<4x64xf32>
    %c1_99 = arith.constant 1 : index
    %c0_100 = arith.constant 0 : index
    %c0_101 = arith.constant 0 : index
    %241 = vector.load %arg11[%c1_99, %c0_100, %c0_101] : memref<2x4x64xf32, #tpu.memory_space<vmem>>, vector<1x4x64xf32>
    %242 = vector.shape_cast %241 : vector<1x4x64xf32> to vector<4x64xf32>
    %243 = vector.shape_cast %240 : vector<4x64xf32> to vector<1x4x64xf32>
    tpu.vector_store %arg11[%c1_99, %c0_100, %c0_101], %243 {strides = array<i32>} : memref<2x4x64xf32, #tpu.memory_space<vmem>>, vector<1x4x64xf32>,
    %244 = vector.extract_strided_slice %220 {offsets = [0, 64], sizes = [2, 64], strides = [1, 1]} : vector<2x128xf32> to vector<2x64xf32>
    %245 = vector.shape_cast %244 : vector<2x64xf32> to vector<1x2x64xf32>
    %cst_102 = arith.constant dense<0.000000e+00> : vector<1xf32>
    %246 = vector.multi_reduction <add>, %245, %cst_102 [1, 2] : vector<1x2x64xf32> to vector<1xf32>
    %247 = vector.shape_cast %246 : vector<1xf32> to vector<1x1x1xf32>
    %248 = vector.extract %247[0, 0, 0] : f32 from vector<1x1x1xf32>
    %c1_103 = arith.constant 1 : index
    %249 = memref.load %arg12[%c1_103] : memref<2xf32, #tpu.memory_space<smem>>
    memref.store %248, %arg12[%c1_103] : memref<2xf32, #tpu.memory_space<smem>>
    return
  }
  func.func @transform_0(%arg0: i32) -> (i32, i32, i32) {
    %c0_i32 = arith.constant 0 : i32
    %c0_i32_0 = arith.constant 0 : i32
    %c0_i32_1 = arith.constant 0 : i32
    %c0_i32_2 = arith.constant 0 : i32
    return %c0_i32, %c0_i32_0, %c0_i32_1 : i32, i32, i32
  }
  func.func @transform_1(%arg0: i32) -> (i32, i32, i32) {
    %c0_i32 = arith.constant 0 : i32
    %c0_i32_0 = arith.constant 0 : i32
    %c0_i32_1 = arith.constant 0 : i32
    %c0_i32_2 = arith.constant 0 : i32
    return %c0_i32, %c0_i32_0, %c0_i32_1 : i32, i32, i32
  }
  func.func @transform_2(%arg0: i32) -> (i32, i32) {
    %c0_i32 = arith.constant 0 : i32
    %c0_i32_0 = arith.constant 0 : i32
    %c0_i32_1 = arith.constant 0 : i32
    return %c0_i32, %c0_i32_0 : i32, i32
  }
  func.func @transform_3(%arg0: i32) -> (i32, i32) {
    %c0_i32 = arith.constant 0 : i32
    %c0_i32_0 = arith.constant 0 : i32
    %c0_i32_1 = arith.constant 0 : i32
    return %c0_i32, %c0_i32_0 : i32, i32
  }
  func.func @transform_4(%arg0: i32) -> (i32, i32, i32) {
    %c0_i32 = arith.constant 0 : i32
    %c0_i32_0 = arith.constant 0 : i32
    %c0_i32_1 = arith.constant 0 : i32
    %c0_i32_2 = arith.constant 0 : i32
    return %c0_i32, %c0_i32_0, %c0_i32_1 : i32, i32, i32
  }
  func.func @transform_5(%arg0: i32) -> (i32, i32, i32) {
    %c0_i32 = arith.constant 0 : i32
    %c0_i32_0 = arith.constant 0 : i32
    %c0_i32_1 = arith.constant 0 : i32
    %c0_i32_2 = arith.constant 0 : i32
    return %c0_i32, %c0_i32_0, %c0_i32_1 : i32, i32, i32
  }
  func.func @transform_6(%arg0: i32) -> (i32, i32, i32) {
    %c0_i32 = arith.constant 0 : i32
    %c0_i32_0 = arith.constant 0 : i32
    %c0_i32_1 = arith.constant 0 : i32
    %c0_i32_2 = arith.constant 0 : i32
    return %c0_i32, %c0_i32_0, %c0_i32_1 : i32, i32, i32
  }
  func.func @transform_7(%arg0: i32) -> (i32, i32, i32) {
    %c0_i32 = arith.constant 0 : i32
    %c0_i32_0 = arith.constant 0 : i32
    %c0_i32_1 = arith.constant 0 : i32
    %c0_i32_2 = arith.constant 0 : i32
    return %c0_i32, %c0_i32_0, %c0_i32_1 : i32, i32, i32
  }
  func.func @transform_8(%arg0: i32) -> (i32, i32) {
    %c0_i32 = arith.constant 0 : i32
    %c0_i32_0 = arith.constant 0 : i32
    %c0_i32_1 = arith.constant 0 : i32
    return %c0_i32, %c0_i32_0 : i32, i32
  }
  func.func @transform_9(%arg0: i32) -> (i32, i32) {
    %c0_i32 = arith.constant 0 : i32
    %c0_i32_0 = arith.constant 0 : i32
    %c0_i32_1 = arith.constant 0 : i32
    return %c0_i32, %c0_i32_0 : i32, i32
  }
  func.func @transform_10(%arg0: i32) -> (i32, i32, i32) {
    %c0_i32 = arith.constant 0 : i32
    %c0_i32_0 = arith.constant 0 : i32
    %c0_i32_1 = arith.constant 0 : i32
    %c0_i32_2 = arith.constant 0 : i32
    return %c0_i32, %c0_i32_0, %c0_i32_1 : i32, i32, i32
  }
  func.func @transform_11(%arg0: i32) -> i32 {
    %c0_i32 = arith.constant 0 : i32
    %c0_i32_0 = arith.constant 0 : i32
    return %c0_i32 : i32
  }
}

</mosaic_0001>

<llo_original>
// kernel: residual_coupling_forward.1
$region0: #{residual_coupling_forward.1}
  #allocation0 [shape = 'u32[]', space=smem, size = 0x4, offset = 0x4, fixed_abs, tag = 'smem constant byte address 0x4 - core index']
  #allocation1 [shape = 'u32[72,128]{1,0:T(1,128)}', space=vmem, size = 0x9000, scoped, tag = 'internal scratch']
  %s0 = inlined_call_operand.vmem [shape: f32[2,4,64], index: 0, kind: input, shape index: {}]
  %s1 = inlined_call_operand.vmem [shape: f32[2,1,64], index: 1, kind: input, shape index: {}]
  %s2 = inlined_call_operand.vmem [shape: f32[32,2], index: 2, kind: input, shape index: {}]
  %s3 = inlined_call_operand.vmem [shape: f32[32,1], index: 3, kind: input, shape index: {}]
  %s4 = inlined_call_operand.vmem [shape: f32[3,64,96], index: 4, kind: input, shape index: {}]
  %s5 = inlined_call_operand.vmem [shape: f32[3,64,1], index: 5, kind: input, shape index: {}]
  %s6 = inlined_call_operand.vmem [shape: f32[3,64,32], index: 6, kind: input, shape index: {}]
  %s7 = inlined_call_operand.vmem [shape: f32[3,64,1], index: 7, kind: input, shape index: {}]
  %s8 = inlined_call_operand.vmem [shape: f32[4,32], index: 8, kind: input, shape index: {}]
  %s9 = inlined_call_operand.vmem [shape: f32[4,1], index: 9, kind: input, shape index: {}]
  %s10 = inlined_call_operand.hbm [shape: f32[2,4,64], index: 10, kind: output, shape index: {0}]
  %s11 = inlined_call_operand.hbm [shape: f32[2], index: 11, kind: output, shape index: {1}]
  %12 = xla_tuple %s10, %s11
  %s13 = sld [smem:[#allocation0]]
  $region58: #{residual_coupling_forward.1} parent=0
    _
  %s15 = ssub.s32 1, %s13
  %s16 = scalar_select 0, %s15, %s13
  $region1: #{residual_coupling_forward.1} parent=0
    #allocation2 [shape = 'u8[4096]{0}', space=vmem, size = 0x1000, scoped, tag = 'output window, operand 0, single buffered']
    #allocation3 [shape = 's32[1]{0}', space=sflag, size = 0x4, scoped, tag = 'scoped memory for residual_coupling_forward.1']
    #allocation4 [shape = 's32[1]{0}', space=sflag, size = 0x4, scoped, tag = 'scoped memory for residual_coupling_forward.1']
    #allocation5 [shape = 'u8[512]{0}', space=smem, size = 0x200, scoped, tag = 'output window, operand 1, single buffered']
    %17 = vsyncpa [#allocation3], 0
    %18 = vsyncpa [#allocation4], 0
    // Predicated region
    $region2: #{residual_coupling_forward.1} parent=1 // pred_check
      _
    $region3: #{residual_coupling_forward.1} parent=1 // pred_check_branch
      %20 = sbr.rel (0) target = $region5
    $region4: #{residual_coupling_forward.1} parent=1 // pred_region
      _
    $region5: #{residual_coupling_forward.1} parent=1 // pred_fallthru
      _
    // Predicated region
    $region6: #{residual_coupling_forward.1} parent=1 // pred_check
      _
    $region7: #{residual_coupling_forward.1} parent=1 // pred_check_branch
      %22 = sbr.rel (0) target = $region9
    $region8: #{residual_coupling_forward.1} parent=1 // pred_region
      _
    $region9: #{residual_coupling_forward.1} parent=1 // pred_fallthru
      _
    // Predicated region
    $region10: #{residual_coupling_forward.1} parent=1 // pred_check
      _
    $region11: #{residual_coupling_forward.1} parent=1 // pred_check_branch
      %24 = sbr.rel (0) target = $region13
    $region12: #{residual_coupling_forward.1} parent=1 // pred_region
      _
    $region13: #{residual_coupling_forward.1} parent=1 // pred_fallthru
      _
    // Predicated region
    $region14: #{residual_coupling_forward.1} parent=1 // pred_check
      _
    $region15: #{residual_coupling_forward.1} parent=1 // pred_check_branch
      %26 = sbr.rel (0) target = $region17
    $region16: #{residual_coupling_forward.1} parent=1 // pred_region
      _
    $region17: #{residual_coupling_forward.1} parent=1 // pred_fallthru
      _
    // Predicated region
    $region18: #{residual_coupling_forward.1} parent=1 // pred_check
      _
    $region19: #{residual_coupling_forward.1} parent=1 // pred_check_branch
      %28 = sbr.rel (0) target = $region21
    $region20: #{residual_coupling_forward.1} parent=1 // pred_region
      _
    $region21: #{residual_coupling_forward.1} parent=1 // pred_fallthru
      _
    // Predicated region
    $region22: #{residual_coupling_forward.1} parent=1 // pred_check
      _
    $region23: #{residual_coupling_forward.1} parent=1 // pred_check_branch
      %30 = sbr.rel (0) target = $region25
    $region24: #{residual_coupling_forward.1} parent=1 // pred_region
      _
    $region25: #{residual_coupling_forward.1} parent=1 // pred_fallthru
      _
    // Predicated region
    $region26: #{residual_coupling_forward.1} parent=1 // pred_check
      _
    $region27: #{residual_coupling_forward.1} parent=1 // pred_check_branch
      %32 = sbr.rel (0) target = $region29
    $region28: #{residual_coupling_forward.1} parent=1 // pred_region
      _
    $region29: #{residual_coupling_forward.1} parent=1 // pred_fallthru
      _
    // Predicated region
    $region30: #{residual_coupling_forward.1} parent=1 // pred_check
      _
    $region31: #{residual_coupling_forward.1} parent=1 // pred_check_branch
      %34 = sbr.rel (0) target = $region33
    $region32: #{residual_coupling_forward.1} parent=1 // pred_region
      _
    $region33: #{residual_coupling_forward.1} parent=1 // pred_fallthru
      _
    // Predicated region
    $region34: #{residual_coupling_forward.1} parent=1 // pred_check
      _
    $region35: #{residual_coupling_forward.1} parent=1 // pred_check_branch
      %36 = sbr.rel (0) target = $region37
    $region36: #{residual_coupling_forward.1} parent=1 // pred_region
      _
    $region37: #{residual_coupling_forward.1} parent=1 // pred_fallthru
      _
    // Predicated region
    $region38: #{residual_coupling_forward.1} parent=1 // pred_check
      _
    $region39: #{residual_coupling_forward.1} parent=1 // pred_check_branch
      %38 = sbr.rel (0) target = $region41
    $region40: #{residual_coupling_forward.1} parent=1 // pred_region
      _
    $region41: #{residual_coupling_forward.1} parent=1 // pred_fallthru
      _
    %v39 = vld [vmem:[%s0] sm:$0xf]
    %s40 = scalar_lea.vmem %s0, 4
    %v41 = vld [vmem:[%s40] sm:$0xf]
    %43 = vrot.lane.b32.xlu0 %v41, 64
    %v44 = vpop.permute.xlu0 %43
    %vm46 = vcmask 523264
    %v47 = vsel %vm46, %v39, %v44
    %v48 = vld [vmem:[%s1] sm:$0x1]
    %s49 = scalar_lea.vmem %s1, 1
    %v50 = vld [vmem:[%s49] sm:$0x1]
    %v52 = vperm.slane %v50, 0
    %53 = vrot.lane.b32.xlu0 %v52, 64
    %v54 = vpop.permute.xlu0 %53
    %v56 = vsel %vm46, %v48, %v54
    %v57 = vperm.slane %v56, 0
    %v58 = vlaneseq
    %v59 = vand.u32 %v58, 127
    %v60 = vand.u32 %v59, 63
    %v61 = vld [vmem:[%s2] sm:$0xff]
    %v62 = vld [vmem:[%s2 + $0x8] sm:$0xff]
    %v63 = vld [vmem:[%s2 + $0x10] sm:$0xff]
    %v64 = vld [vmem:[%s2 + $0x18] sm:$0xff]
    %v65 = vld [vmem:[%s3] sm:$0xff]
    %v66 = vld [vmem:[%s3 + $0x8] sm:$0xff]
    %v67 = vld [vmem:[%s3 + $0x10] sm:$0xff]
    %v68 = vld [vmem:[%s3 + $0x18] sm:$0xff]
    %70 = vset.pattern.permute.xlu0 0
    %71 = vperm.xlu0 %70, %v61
    %v72 = vpop.permute.xlu0 %71
    %75 = vset.pattern.permute.xlu0 0
    %76 = vperm.xlu0 %75, %v62
    %v77 = vpop.permute.xlu0 %76
    %80 = vset.pattern.permute.xlu0 0
    %81 = vperm.xlu0 %80, %v63
    %v82 = vpop.permute.xlu0 %81
    %85 = vset.pattern.permute.xlu0 0
    %86 = vperm.xlu0 %85, %v64
    %v87 = vpop.permute.xlu0 %86
    %v89 = vperm.slane %v47, 0
    %v90 = vmul.f32 %v72, %v89
    %v91 = vmul.f32 %v77, %v89
    %v92 = vmul.f32 %v82, %v89
    %v93 = vmul.f32 %v87, %v89
    %95 = vset.pattern.permute.xlu0 0
    %96 = vperm.xlu0 %95, %v65
    %v97 = vpop.permute.xlu0 %96
    %100 = vset.pattern.permute.xlu0 0
    %101 = vperm.xlu0 %100, %v66
    %v102 = vpop.permute.xlu0 %101
    %105 = vset.pattern.permute.xlu0 0
    %106 = vperm.xlu0 %105, %v67
    %v107 = vpop.permute.xlu0 %106
    %110 = vset.pattern.permute.xlu0 0
    %111 = vperm.xlu0 %110, %v68
    %v112 = vpop.permute.xlu0 %111
    %v114 = vadd.f32 %v97, %v90
    %v115 = vadd.f32 %v102, %v91
    %v116 = vadd.f32 %v107, %v92
    %v117 = vadd.f32 %v112, %v93
    %118 = vset.pattern.permute.xlu0 1
    %119 = vperm.xlu0 %118, %v61
    %v120 = vpop.permute.xlu0 %119
    %122 = vset.pattern.permute.xlu0 1
    %123 = vperm.xlu0 %122, %v62
    %v124 = vpop.permute.xlu0 %123
    %126 = vset.pattern.permute.xlu0 1
    %127 = vperm.xlu0 %126, %v63
    %v128 = vpop.permute.xlu0 %127
    %130 = vset.pattern.permute.xlu0 1
    %131 = vperm.xlu0 %130, %v64
    %v132 = vpop.permute.xlu0 %131
    %v134 = vperm.slane %v47, 1
    %v135 = vmul.f32 %v120, %v134
    %v136 = vmul.f32 %v124, %v134
    %v137 = vmul.f32 %v128, %v134
    %v138 = vmul.f32 %v132, %v134
    %v139 = vadd.f32 %v114, %v135
    %v140 = vadd.f32 %v115, %v136
    %v141 = vadd.f32 %v116, %v137
    %v142 = vadd.f32 %v117, %v138
    %v143 = vmul.f32 %v139, %v57
    %v144 = vmul.f32 %v140, %v57
    %v145 = vmul.f32 %v141, %v57
    %v146 = vmul.f32 %v142, %v57
    %147 = vrot.lane.b32.xlu0 %v143, 1
    %v148 = vpop.permute.xlu0 %147
    %149 = vrot.lane.b32.xlu0 %v144, 1
    %v150 = vpop.permute.xlu0 %149
    %151 = vrot.lane.b32.xlu0 %v145, 1
    %v152 = vpop.permute.xlu0 %151
    %153 = vrot.lane.b32.xlu0 %v146, 1
    %v154 = vpop.permute.xlu0 %153
    %v155 = vadd.s32 %v60, 4294967295
    %vm156 = vcmp.ge.s32.totalorder %v155, 0
    %vm157 = vcmp.lt.s32.totalorder %v155, 64
    %vm158 = vmand %vm156, %vm157
    %v159 = vsel %vm158, 1.0, 0.0
    %v160 = vmul.f32 %v148, %v159
    %v161 = vmul.f32 %v150, %v159
    %v162 = vmul.f32 %v152, %v159
    %v163 = vmul.f32 %v154, %v159
    %164 = vrot.lane.b32.xlu0 %v143, 127
    %v165 = vpop.permute.xlu0 %164
    %166 = vrot.lane.b32.xlu0 %v144, 127
    %v167 = vpop.permute.xlu0 %166
    %168 = vrot.lane.b32.xlu0 %v145, 127
    %v169 = vpop.permute.xlu0 %168
    %170 = vrot.lane.b32.xlu0 %v146, 127
    %v171 = vpop.permute.xlu0 %170
    %v172 = vadd.s32 %v60, 1
    %vm173 = vcmp.ge.s32.totalorder %v172, 0
    %vm174 = vcmp.lt.s32.totalorder %v172, 64
    %vm175 = vmand %vm173, %vm174
    %v176 = vsel %vm175, 1.0, 0.0
    %v177 = vmul.f32 %v165, %v176
    %v178 = vmul.f32 %v167, %v176
    %v179 = vmul.f32 %v169, %v176
    %v180 = vmul.f32 %v171, %v176
    %v181 = vld [vmem:[%s4] sm:$0xff]
    %v182 = vld [vmem:[%s4 + $0x8] sm:$0xff]
    %v183 = vld [vmem:[%s4 + $0x10] sm:$0xff]
    %v184 = vld [vmem:[%s4 + $0x18] sm:$0xff]
    %v185 = vld [vmem:[%s4 + $0x20] sm:$0xff]
    %v186 = vld [vmem:[%s4 + $0x28] sm:$0xff]
    %v187 = vld [vmem:[%s4 + $0x30] sm:$0xff]
    %v188 = vld [vmem:[%s4 + $0x38] sm:$0xff]
    %v189 = vld [vmem:[%s5] sm:$0xff]
    %v190 = vld [vmem:[%s5 + $0x8] sm:$0xff]
    %v191 = vld [vmem:[%s5 + $0x10] sm:$0xff]
    %v192 = vld [vmem:[%s5 + $0x18] sm:$0xff]
    %v193 = vld [vmem:[%s5 + $0x20] sm:$0xff]
    %v194 = vld [vmem:[%s5 + $0x28] sm:$0xff]
    %v195 = vld [vmem:[%s5 + $0x30] sm:$0xff]
    %v196 = vld [vmem:[%s5 + $0x38] sm:$0xff]
    %198 = vset.pattern.permute.xlu0 0
    %199 = vperm.xlu0 %198, %v189
    %v200 = vpop.permute.xlu0 %199
    %203 = vset.pattern.permute.xlu0 0
    %204 = vperm.xlu0 %203, %v190
    %v205 = vpop.permute.xlu0 %204
    %208 = vset.pattern.permute.xlu0 0
    %209 = vperm.xlu0 %208, %v191
    %v210 = vpop.permute.xlu0 %209
    %213 = vset.pattern.permute.xlu0 0
    %214 = vperm.xlu0 %213, %v192
    %v215 = vpop.permute.xlu0 %214
    %218 = vset.pattern.permute.xlu0 0
    %219 = vperm.xlu0 %218, %v193
    %v220 = vpop.permute.xlu0 %219
    %223 = vset.pattern.permute.xlu0 0
    %224 = vperm.xlu0 %223, %v194
    %v225 = vpop.permute.xlu0 %224
    %228 = vset.pattern.permute.xlu0 0
    %229 = vperm.xlu0 %228, %v195
    %v230 = vpop.permute.xlu0 %229
    %233 = vset.pattern.permute.xlu0 0
    %234 = vperm.xlu0 %233, %v196
    %v235 = vpop.permute.xlu0 %234
    %vm237 = vcmask 785408
    %v239 = vsel %vm237, %v181, 0
    %v242 = vsel %vm237, %v182, 0
    %v245 = vsel %vm237, %v183, 0
    %v248 = vsel %vm237, %v184, 0
    %v251 = vsel %vm237, %v185, 0
    %v254 = vsel %vm237, %v186, 0
    %v257 = vsel %vm237, %v187, 0
    %v260 = vsel %vm237, %v188, 0
    %262 = vmatpush.msra.mxu0 0.0
    %263 = vmatpush.msra.mxu0 0.0
    %264 = vmatpush.msra.mxu0 0.0
    %265 = vmatpush.msra.mxu0 0.0
    %266 = vmatpush.msra.mxu0 %v180
    %267 = vmatpush.msra.mxu0 %v179
    %268 = vmatpush.msra.mxu0 %v178
    %269 = vmatpush.msra.mxu0 %v177
    %270 = vmatpush.msra.mxu0 %v146
    %271 = vmatpush.msra.mxu0 %v145
    %272 = vmatpush.msra.mxu0 %v144
    %273 = vmatpush.msra.mxu0 %v143
    %274 = vmatpush.msra.mxu0 %v163
    %275 = vmatpush.msra.mxu0 %v162
    %276 = vmatpush.msra.mxu0 %v161
    %277 = vmatpush.msra.mxu0 %v160
    %278 = vmatmul.f32.gmra.mxu0 %v239
    %v279 = vpop.f32.mrf.mxu0
    %v280 = vadd.f32 %v200, %v279
    %281 = vmatmul.f32.gmra.mxu0 %v242
    %v282 = vpop.f32.mrf.mxu0
    %v283 = vadd.f32 %v205, %v282
    %284 = vmatmul.f32.gmra.mxu0 %v245
    %v285 = vpop.f32.mrf.mxu0
    %v286 = vadd.f32 %v210, %v285
    %287 = vmatmul.f32.gmra.mxu0 %v248
    %v288 = vpop.f32.mrf.mxu0
    %v289 = vadd.f32 %v215, %v288
    %290 = vmatmul.f32.gmra.mxu0 %v251
    %v291 = vpop.f32.mrf.mxu0
    %v292 = vadd.f32 %v220, %v291
    %293 = vmatmul.f32.gmra.mxu0 %v254
    %v294 = vpop.f32.mrf.mxu0
    %v295 = vadd.f32 %v225, %v294
    %296 = vmatmul.f32.gmra.mxu0 %v257
    %v297 = vpop.f32.mrf.mxu0
    %v298 = vadd.f32 %v230, %v297
    %299 = vmatmul.f32.gmra.mxu0 %v260
    %v300 = vpop.f32.mrf.mxu0
    %v301 = vadd.f32 %v235, %v300
    %302 = vdwg.mxu0
    %v303 = vtanh.pop %v280
    %v304 = vtanh.pop %v283
    %v305 = vtanh.pop %v286
    %v306 = vtanh.pop %v289
    %v307 = vxor.u32 %v292, 2147483648
    %v308 = vxor.u32 %v295, 2147483648
    %v309 = vxor.u32 %v298, 2147483648
    %v310 = vxor.u32 %v301, 2147483648
    %v311 = vmul.f32 %v307, 1.442695
    %v312 = vpow.pop %v311
    %v313 = vmul.f32 %v308, 1.442695
    %v314 = vpow.pop %v313
    %v315 = vmul.f32 %v309, 1.442695
    %v316 = vpow.pop %v315
    %v317 = vmul.f32 %v310, 1.442695
    %v318 = vpow.pop %v317
    %v319 = vadd.f32 %v312, 1.0
    %v320 = vadd.f32 %v314, 1.0
    %v321 = vadd.f32 %v316, 1.0
    %v322 = vadd.f32 %v318, 1.0
    %v323 = vrcp.pop %v319
    %v324 = vmul.f32 %v319, %v323
    %v325 = vsub.f32 1.0, %v324
    %v326 = vmul.f32 %v323, %v325
    %v327 = vadd.f32 %v323, %v326
    %vm328 = vweird.f32 %v319
    %vm329 = vweird.f32 %v323
    %vm330 = vmor %vm328, %vm329
    %v331 = vsel %vm330, %v323, %v327
    %v332 = vand.u32 2147483647, %v319
    %vm333 = vcmp.eq.f32.partialorder %v332, 8.507059e+37
    %v334 = vand.u32 %v319, 2147483648
    %v335 = vor.u32 1.1754944e-38, %v334
    %v336 = vsel %vm333, %v335, %v331
    %v337 = vmul.f32 1.0, %v336
    %v338 = vrcp.pop %v320
    %v339 = vmul.f32 %v320, %v338
    %v340 = vsub.f32 1.0, %v339
    %v341 = vmul.f32 %v338, %v340
    %v342 = vadd.f32 %v338, %v341
    %vm343 = vweird.f32 %v320
    %vm344 = vweird.f32 %v338
    %vm345 = vmor %vm343, %vm344
    %v346 = vsel %vm345, %v338, %v342
    %v347 = vand.u32 2147483647, %v320
    %vm348 = vcmp.eq.f32.partialorder %v347, 8.507059e+37
    %v349 = vand.u32 %v320, 2147483648
    %v350 = vor.u32 1.1754944e-38, %v349
    %v351 = vsel %vm348, %v350, %v346
    %v352 = vmul.f32 1.0, %v351
    %v353 = vrcp.pop %v321
    %v354 = vmul.f32 %v321, %v353
    %v355 = vsub.f32 1.0, %v354
    %v356 = vmul.f32 %v353, %v355
    %v357 = vadd.f32 %v353, %v356
    %vm358 = vweird.f32 %v321
    %vm359 = vweird.f32 %v353
    %vm360 = vmor %vm358, %vm359
    %v361 = vsel %vm360, %v353, %v357
    %v362 = vand.u32 2147483647, %v321
    %vm363 = vcmp.eq.f32.partialorder %v362, 8.507059e+37
    %v364 = vand.u32 %v321, 2147483648
    %v365 = vor.u32 1.1754944e-38, %v364
    %v366 = vsel %vm363, %v365, %v361
    %v367 = vmul.f32 1.0, %v366
    %v368 = vrcp.pop %v322
    %v369 = vmul.f32 %v322, %v368
    %v370 = vsub.f32 1.0, %v369
    %v371 = vmul.f32 %v368, %v370
    %v372 = vadd.f32 %v368, %v371
    %vm373 = vweird.f32 %v322
    %vm374 = vweird.f32 %v368
    %vm375 = vmor %vm373, %vm374
    %v376 = vsel %vm375, %v368, %v372
    %v377 = vand.u32 2147483647, %v322
    %vm378 = vcmp.eq.f32.partialorder %v377, 8.507059e+37
    %v379 = vand.u32 %v322, 2147483648
    %v380 = vor.u32 1.1754944e-38, %v379
    %v381 = vsel %vm378, %v380, %v376
    %v382 = vmul.f32 1.0, %v381
    %v383 = vmul.f32 %v303, %v337
    %v384 = vmul.f32 %v304, %v352
    %v385 = vmul.f32 %v305, %v367
    %v386 = vmul.f32 %v306, %v382
    %v387 = vld [vmem:[%s6] sm:$0xff]
    %v388 = vld [vmem:[%s6 + $0x8] sm:$0xff]
    %v389 = vld [vmem:[%s6 + $0x10] sm:$0xff]
    %v390 = vld [vmem:[%s6 + $0x18] sm:$0xff]
    %v391 = vld [vmem:[%s6 + $0x20] sm:$0xff]
    %v392 = vld [vmem:[%s6 + $0x28] sm:$0xff]
    %v393 = vld [vmem:[%s6 + $0x30] sm:$0xff]
    %v394 = vld [vmem:[%s6 + $0x38] sm:$0xff]
    %v395 = vld [vmem:[%s7] sm:$0xff]
    %v396 = vld [vmem:[%s7 + $0x8] sm:$0xff]
    %v397 = vld [vmem:[%s7 + $0x10] sm:$0xff]
    %v398 = vld [vmem:[%s7 + $0x18] sm:$0xff]
    %v399 = vld [vmem:[%s7 + $0x20] sm:$0xff]
    %v400 = vld [vmem:[%s7 + $0x28] sm:$0xff]
    %v401 = vld [vmem:[%s7 + $0x30] sm:$0xff]
    %v402 = vld [vmem:[%s7 + $0x38] sm:$0xff]
    %404 = vset.pattern.permute.xlu0 0
    %405 = vperm.xlu0 %404, %v395
    %v406 = vpop.permute.xlu0 %405
    %409 = vset.pattern.permute.xlu0 0
    %410 = vperm.xlu0 %409, %v396
    %v411 = vpop.permute.xlu0 %410
    %414 = vset.pattern.permute.xlu0 0
    %415 = vperm.xlu0 %414, %v397
    %v416 = vpop.permute.xlu0 %415
    %419 = vset.pattern.permute.xlu0 0
    %420 = vperm.xlu0 %419, %v398
    %v421 = vpop.permute.xlu0 %420
    %424 = vset.pattern.permute.xlu0 0
    %425 = vperm.xlu0 %424, %v399
    %v426 = vpop.permute.xlu0 %425
    %429 = vset.pattern.permute.xlu0 0
    %430 = vperm.xlu0 %429, %v400
    %v431 = vpop.permute.xlu0 %430
    %434 = vset.pattern.permute.xlu0 0
    %435 = vperm.xlu0 %434, %v401
    %v436 = vpop.permute.xlu0 %435
    %439 = vset.pattern.permute.xlu0 0
    %440 = vperm.xlu0 %439, %v402
    %v441 = vpop.permute.xlu0 %440
    %vm443 = vcmask 261120
    %v445 = vsel %vm443, %v387, 0
    %v448 = vsel %vm443, %v388, 0
    %v451 = vsel %vm443, %v389, 0
    %v454 = vsel %vm443, %v390, 0
    %v457 = vsel %vm443, %v391, 0
    %v460 = vsel %vm443, %v392, 0
    %v463 = vsel %vm443, %v393, 0
    %v466 = vsel %vm443, %v394, 0
    %468 = vmatpush.msra.mxu0 0.0
    %469 = vmatpush.msra.mxu0 0.0
    %470 = vmatpush.msra.mxu0 0.0
    %471 = vmatpush.msra.mxu0 0.0
    %472 = vmatpush.msra.mxu0 0.0
    %473 = vmatpush.msra.mxu0 0.0
    %474 = vmatpush.msra.mxu0 0.0
    %475 = vmatpush.msra.mxu0 0.0
    %476 = vmatpush.msra.mxu0 0.0
    %477 = vmatpush.msra.mxu0 0.0
    %478 = vmatpush.msra.mxu0 0.0
    %479 = vmatpush.msra.mxu0 0.0
    %480 = vmatpush.msra.mxu0 %v386
    %481 = vmatpush.msra.mxu0 %v385
    %482 = vmatpush.msra.mxu0 %v384
    %483 = vmatpush.msra.mxu0 %v383
    %484 = vmatmul.f32.gmra.mxu0 %v445
    %v485 = vpop.f32.mrf.mxu0
    %v486 = vadd.f32 %v406, %v485
    %487 = vmatmul.f32.gmra.mxu0 %v448
    %v488 = vpop.f32.mrf.mxu0
    %v489 = vadd.f32 %v411, %v488
    %490 = vmatmul.f32.gmra.mxu0 %v451
    %v491 = vpop.f32.mrf.mxu0
    %v492 = vadd.f32 %v416, %v491
    %493 = vmatmul.f32.gmra.mxu0 %v454
    %v494 = vpop.f32.mrf.mxu0
    %v495 = vadd.f32 %v421, %v494
    %496 = vmatmul.f32.gmra.mxu0 %v457
    %v497 = vpop.f32.mrf.mxu0
    %v498 = vadd.f32 %v426, %v497
    %499 = vmatmul.f32.gmra.mxu0 %v460
    %v500 = vpop.f32.mrf.mxu0
    %v501 = vadd.f32 %v431, %v500
    %502 = vmatmul.f32.gmra.mxu0 %v463
    %v503 = vpop.f32.mrf.mxu0
    %v504 = vadd.f32 %v436, %v503
    %505 = vmatmul.f32.gmra.mxu0 %v466
    %v506 = vpop.f32.mrf.mxu0
    %v507 = vadd.f32 %v441, %v506
    %508 = vdwg.mxu0
    %v509 = vadd.f32 %v143, %v486
    %v510 = vadd.f32 %v144, %v489
    %v511 = vadd.f32 %v145, %v492
    %v512 = vadd.f32 %v146, %v495
    %v513 = vmul.f32 %v509, %v57
    %v514 = vmul.f32 %v510, %v57
    %v515 = vmul.f32 %v511, %v57
    %v516 = vmul.f32 %v512, %v57
    %v517 = vadd.f32 %v498, 0.0
    %v518 = vadd.f32 %v501, 0.0
    %v519 = vadd.f32 %v504, 0.0
    %v520 = vadd.f32 %v507, 0.0
    %521 = vrot.lane.b32.xlu0 %v513, 2
    %v522 = vpop.permute.xlu0 %521
    %523 = vrot.lane.b32.xlu0 %v514, 2
    %v524 = vpop.permute.xlu0 %523
    %525 = vrot.lane.b32.xlu0 %v515, 2
    %v526 = vpop.permute.xlu0 %525
    %527 = vrot.lane.b32.xlu0 %v516, 2
    %v528 = vpop.permute.xlu0 %527
    %v529 = vadd.s32 %v60, 4294967294
    %vm530 = vcmp.ge.s32.totalorder %v529, 0
    %vm531 = vcmp.lt.s32.totalorder %v529, 64
    %vm532 = vmand %vm530, %vm531
    %v533 = vsel %vm532, 1.0, 0.0
    %v534 = vmul.f32 %v522, %v533
    %v535 = vmul.f32 %v524, %v533
    %v536 = vmul.f32 %v526, %v533
    %v537 = vmul.f32 %v528, %v533
    %538 = vrot.lane.b32.xlu0 %v513, 126
    %v539 = vpop.permute.xlu0 %538
    %540 = vrot.lane.b32.xlu0 %v514, 126
    %v541 = vpop.permute.xlu0 %540
    %542 = vrot.lane.b32.xlu0 %v515, 126
    %v543 = vpop.permute.xlu0 %542
    %544 = vrot.lane.b32.xlu0 %v516, 126
    %v545 = vpop.permute.xlu0 %544
    %v546 = vadd.s32 %v60, 2
    %vm547 = vcmp.ge.s32.totalorder %v546, 0
    %vm548 = vcmp.lt.s32.totalorder %v546, 64
    %vm549 = vmand %vm547, %vm548
    %v550 = vsel %vm549, 1.0, 0.0
    %v551 = vmul.f32 %v539, %v550
    %v552 = vmul.f32 %v541, %v550
    %v553 = vmul.f32 %v543, %v550
    %v554 = vmul.f32 %v545, %v550
    %s555 = scalar_lea.vmem %s4, 64
    %v556 = vld [vmem:[%s555] sm:$0xff]
    %v557 = vld [vmem:[%s555 + $0x8] sm:$0xff]
    %v558 = vld [vmem:[%s555 + $0x10] sm:$0xff]
    %v559 = vld [vmem:[%s555 + $0x18] sm:$0xff]
    %v560 = vld [vmem:[%s555 + $0x20] sm:$0xff]
    %v561 = vld [vmem:[%s555 + $0x28] sm:$0xff]
    %v562 = vld [vmem:[%s555 + $0x30] sm:$0xff]
    %v563 = vld [vmem:[%s555 + $0x38] sm:$0xff]
    %s564 = scalar_lea.vmem %s5, 64
    %v565 = vld [vmem:[%s564] sm:$0xff]
    %v566 = vld [vmem:[%s564 + $0x8] sm:$0xff]
    %v567 = vld [vmem:[%s564 + $0x10] sm:$0xff]
    %v568 = vld [vmem:[%s564 + $0x18] sm:$0xff]
    %v569 = vld [vmem:[%s564 + $0x20] sm:$0xff]
    %v570 = vld [vmem:[%s564 + $0x28] sm:$0xff]
    %v571 = vld [vmem:[%s564 + $0x30] sm:$0xff]
    %v572 = vld [vmem:[%s564 + $0x38] sm:$0xff]
    %574 = vset.pattern.permute.xlu0 0
    %575 = vperm.xlu0 %574, %v565
    %v576 = vpop.permute.xlu0 %575
    %579 = vset.pattern.permute.xlu0 0
    %580 = vperm.xlu0 %579, %v566
    %v581 = vpop.permute.xlu0 %580
    %584 = vset.pattern.permute.xlu0 0
    %585 = vperm.xlu0 %584, %v567
    %v586 = vpop.permute.xlu0 %585
    %589 = vset.pattern.permute.xlu0 0
    %590 = vperm.xlu0 %589, %v568
    %v591 = vpop.permute.xlu0 %590
    %594 = vset.pattern.permute.xlu0 0
    %595 = vperm.xlu0 %594, %v569
    %v596 = vpop.permute.xlu0 %595
    %599 = vset.pattern.permute.xlu0 0
    %600 = vperm.xlu0 %599, %v570
    %v601 = vpop.permute.xlu0 %600
    %604 = vset.pattern.permute.xlu0 0
    %605 = vperm.xlu0 %604, %v571
    %v606 = vpop.permute.xlu0 %605
    %609 = vset.pattern.permute.xlu0 0
    %610 = vperm.xlu0 %609, %v572
    %v611 = vpop.permute.xlu0 %610
    %v614 = vsel %vm237, %v556, 0
    %v617 = vsel %vm237, %v557, 0
    %v620 = vsel %vm237, %v558, 0
    %v623 = vsel %vm237, %v559, 0
    %v626 = vsel %vm237, %v560, 0
    %v629 = vsel %vm237, %v561, 0
    %v632 = vsel %vm237, %v562, 0
    %v635 = vsel %vm237, %v563, 0
    %637 = vmatpush.msra.mxu0 0.0
    %638 = vmatpush.msra.mxu0 0.0
    %639 = vmatpush.msra.mxu0 0.0
    %640 = vmatpush.msra.mxu0 0.0
    %641 = vmatpush.msra.mxu0 %v554
    %642 = vmatpush.msra.mxu0 %v553
    %643 = vmatpush.msra.mxu0 %v552
    %644 = vmatpush.msra.mxu0 %v551
    %645 = vmatpush.msra.mxu0 %v516
    %646 = vmatpush.msra.mxu0 %v515
    %647 = vmatpush.msra.mxu0 %v514
    %648 = vmatpush.msra.mxu0 %v513
    %649 = vmatpush.msra.mxu0 %v537
    %650 = vmatpush.msra.mxu0 %v536
    %651 = vmatpush.msra.mxu0 %v535
    %652 = vmatpush.msra.mxu0 %v534
    %653 = vmatmul.f32.gmra.mxu0 %v614
    %v654 = vpop.f32.mrf.mxu0
    %v655 = vadd.f32 %v576, %v654
    %656 = vmatmul.f32.gmra.mxu0 %v617
    %v657 = vpop.f32.mrf.mxu0
    %v658 = vadd.f32 %v581, %v657
    %659 = vmatmul.f32.gmra.mxu0 %v620
    %v660 = vpop.f32.mrf.mxu0
    %v661 = vadd.f32 %v586, %v660
    %662 = vmatmul.f32.gmra.mxu0 %v623
    %v663 = vpop.f32.mrf.mxu0
    %v664 = vadd.f32 %v591, %v663
    %665 = vmatmul.f32.gmra.mxu0 %v626
    %v666 = vpop.f32.mrf.mxu0
    %v667 = vadd.f32 %v596, %v666
    %668 = vmatmul.f32.gmra.mxu0 %v629
    %v669 = vpop.f32.mrf.mxu0
    %v670 = vadd.f32 %v601, %v669
    %671 = vmatmul.f32.gmra.mxu0 %v632
    %v672 = vpop.f32.mrf.mxu0
    %v673 = vadd.f32 %v606, %v672
    %674 = vmatmul.f32.gmra.mxu0 %v635
    %v675 = vpop.f32.mrf.mxu0
    %v676 = vadd.f32 %v611, %v675
    %677 = vdwg.mxu0
    %v678 = vtanh.pop %v655
    %v679 = vtanh.pop %v658
    %v680 = vtanh.pop %v661
    %v681 = vtanh.pop %v664
    %v682 = vxor.u32 %v667, 2147483648
    %v683 = vxor.u32 %v670, 2147483648
    %v684 = vxor.u32 %v673, 2147483648
    %v685 = vxor.u32 %v676, 2147483648
    %v686 = vmul.f32 %v682, 1.442695
    %v687 = vpow.pop %v686
    %v688 = vmul.f32 %v683, 1.442695
    %v689 = vpow.pop %v688
    %v690 = vmul.f32 %v684, 1.442695
    %v691 = vpow.pop %v690
    %v692 = vmul.f32 %v685, 1.442695
    %v693 = vpow.pop %v692
    %v694 = vadd.f32 %v687, 1.0
    %v695 = vadd.f32 %v689, 1.0
    %v696 = vadd.f32 %v691, 1.0
    %v697 = vadd.f32 %v693, 1.0
    %v698 = vrcp.pop %v694
    %v699 = vmul.f32 %v694, %v698
    %v700 = vsub.f32 1.0, %v699
    %v701 = vmul.f32 %v698, %v700
    %v702 = vadd.f32 %v698, %v701
    %vm703 = vweird.f32 %v694
    %vm704 = vweird.f32 %v698
    %vm705 = vmor %vm703, %vm704
    %v706 = vsel %vm705, %v698, %v702
    %v707 = vand.u32 2147483647, %v694
    %vm708 = vcmp.eq.f32.partialorder %v707, 8.507059e+37
    %v709 = vand.u32 %v694, 2147483648
    %v710 = vor.u32 1.1754944e-38, %v709
    %v711 = vsel %vm708, %v710, %v706
    %v712 = vmul.f32 1.0, %v711
    %v713 = vrcp.pop %v695
    %v714 = vmul.f32 %v695, %v713
    %v715 = vsub.f32 1.0, %v714
    %v716 = vmul.f32 %v713, %v715
    %v717 = vadd.f32 %v713, %v716
    %vm718 = vweird.f32 %v695
    %vm719 = vweird.f32 %v713
    %vm720 = vmor %vm718, %vm719
    %v721 = vsel %vm720, %v713, %v717
    %v722 = vand.u32 2147483647, %v695
    %vm723 = vcmp.eq.f32.partialorder %v722, 8.507059e+37
    %v724 = vand.u32 %v695, 2147483648
    %v725 = vor.u32 1.1754944e-38, %v724
    %v726 = vsel %vm723, %v725, %v721
    %v727 = vmul.f32 1.0, %v726
    %v728 = vrcp.pop %v696
    %v729 = vmul.f32 %v696, %v728
    %v730 = vsub.f32 1.0, %v729
    %v731 = vmul.f32 %v728, %v730
    %v732 = vadd.f32 %v728, %v731
    %vm733 = vweird.f32 %v696
    %vm734 = vweird.f32 %v728
    %vm735 = vmor %vm733, %vm734
    %v736 = vsel %vm735, %v728, %v732
    %v737 = vand.u32 2147483647, %v696
    %vm738 = vcmp.eq.f32.partialorder %v737, 8.507059e+37
    %v739 = vand.u32 %v696, 2147483648
    %v740 = vor.u32 1.1754944e-38, %v739
    %v741 = vsel %vm738, %v740, %v736
    %v742 = vmul.f32 1.0, %v741
    %v743 = vrcp.pop %v697
    %v744 = vmul.f32 %v697, %v743
    %v745 = vsub.f32 1.0, %v744
    %v746 = vmul.f32 %v743, %v745
    %v747 = vadd.f32 %v743, %v746
    %vm748 = vweird.f32 %v697
    %vm749 = vweird.f32 %v743
    %vm750 = vmor %vm748, %vm749
    %v751 = vsel %vm750, %v743, %v747
    %v752 = vand.u32 2147483647, %v697
    %vm753 = vcmp.eq.f32.partialorder %v752, 8.507059e+37
    %v754 = vand.u32 %v697, 2147483648
    %v755 = vor.u32 1.1754944e-38, %v754
    %v756 = vsel %vm753, %v755, %v751
    %v757 = vmul.f32 1.0, %v756
    %v758 = vmul.f32 %v678, %v712
    %v759 = vmul.f32 %v679, %v727
    %v760 = vmul.f32 %v680, %v742
    %v761 = vmul.f32 %v681, %v757
    %s762 = scalar_lea.vmem %s6, 64
    %v763 = vld [vmem:[%s762] sm:$0xff]
    %v764 = vld [vmem:[%s762 + $0x8] sm:$0xff]
    %v765 = vld [vmem:[%s762 + $0x10] sm:$0xff]
    %v766 = vld [vmem:[%s762 + $0x18] sm:$0xff]
    %v767 = vld [vmem:[%s762 + $0x20] sm:$0xff]
    %v768 = vld [vmem:[%s762 + $0x28] sm:$0xff]
    %v769 = vld [vmem:[%s762 + $0x30] sm:$0xff]
    %v770 = vld [vmem:[%s762 + $0x38] sm:$0xff]
    %s771 = scalar_lea.vmem %s7, 64
    %v772 = vld [vmem:[%s771] sm:$0xff]
    %v773 = vld [vmem:[%s771 + $0x8] sm:$0xff]
    %v774 = vld [vmem:[%s771 + $0x10] sm:$0xff]
    %v775 = vld [vmem:[%s771 + $0x18] sm:$0xff]
    %v776 = vld [vmem:[%s771 + $0x20] sm:$0xff]
    %v777 = vld [vmem:[%s771 + $0x28] sm:$0xff]
    %v778 = vld [vmem:[%s771 + $0x30] sm:$0xff]
    %v779 = vld [vmem:[%s771 + $0x38] sm:$0xff]
    %781 = vset.pattern.permute.xlu0 0
    %782 = vperm.xlu0 %781, %v772
    %v783 = vpop.permute.xlu0 %782
    %786 = vset.pattern.permute.xlu0 0
    %787 = vperm.xlu0 %786, %v773
    %v788 = vpop.permute.xlu0 %787
    %791 = vset.pattern.permute.xlu0 0
    %792 = vperm.xlu0 %791, %v774
    %v793 = vpop.permute.xlu0 %792
    %796 = vset.pattern.permute.xlu0 0
    %797 = vperm.xlu0 %796, %v775
    %v798 = vpop.permute.xlu0 %797
    %801 = vset.pattern.permute.xlu0 0
    %802 = vperm.xlu0 %801, %v776
    %v803 = vpop.permute.xlu0 %802
    %806 = vset.pattern.permute.xlu0 0
    %807 = vperm.xlu0 %806, %v777
    %v808 = vpop.permute.xlu0 %807
    %811 = vset.pattern.permute.xlu0 0
    %812 = vperm.xlu0 %811, %v778
    %v813 = vpop.permute.xlu0 %812
    %816 = vset.pattern.permute.xlu0 0
    %817 = vperm.xlu0 %816, %v779
    %v818 = vpop.permute.xlu0 %817
    %v821 = vsel %vm443, %v763, 0
    %v824 = vsel %vm443, %v764, 0
    %v827 = vsel %vm443, %v765, 0
    %v830 = vsel %vm443, %v766, 0
    %v833 = vsel %vm443, %v767, 0
    %v836 = vsel %vm443, %v768, 0
    %v839 = vsel %vm443, %v769, 0
    %v842 = vsel %vm443, %v770, 0
    %844 = vmatpush.msra.mxu0 0.0
    %845 = vmatpush.msra.mxu0 0.0
    %846 = vmatpush.msra.mxu0 0.0
    %847 = vmatpush.msra.mxu0 0.0
    %848 = vmatpush.msra.mxu0 0.0
    %849 = vmatpush.msra.mxu0 0.0
    %850 = vmatpush.msra.mxu0 0.0
    %851 = vmatpush.msra.mxu0 0.0
    %852 = vmatpush.msra.mxu0 0.0
    %853 = vmatpush.msra.mxu0 0.0
    %854 = vmatpush.msra.mxu0 0.0
    %855 = vmatpush.msra.mxu0 0.0
    %856 = vmatpush.msra.mxu0 %v761
    %857 = vmatpush.msra.mxu0 %v760
    %858 = vmatpush.msra.mxu0 %v759
    %859 = vmatpush.msra.mxu0 %v758
    %860 = vmatmul.f32.gmra.mxu0 %v821
    %v861 = vpop.f32.mrf.mxu0
    %v862 = vadd.f32 %v783, %v861
    %863 = vmatmul.f32.gmra.mxu0 %v824
    %v864 = vpop.f32.mrf.mxu0
    %v865 = vadd.f32 %v788, %v864
    %866 = vmatmul.f32.gmra.mxu0 %v827
    %v867 = vpop.f32.mrf.mxu0
    %v868 = vadd.f32 %v793, %v867
    %869 = vmatmul.f32.gmra.mxu0 %v830
    %v870 = vpop.f32.mrf.mxu0
    %v871 = vadd.f32 %v798, %v870
    %872 = vmatmul.f32.gmra.mxu0 %v833
    %v873 = vpop.f32.mrf.mxu0
    %v874 = vadd.f32 %v803, %v873
    %875 = vmatmul.f32.gmra.mxu0 %v836
    %v876 = vpop.f32.mrf.mxu0
    %v877 = vadd.f32 %v808, %v876
    %878 = vmatmul.f32.gmra.mxu0 %v839
    %v879 = vpop.f32.mrf.mxu0
    %v880 = vadd.f32 %v813, %v879
    %881 = vmatmul.f32.gmra.mxu0 %v842
    %v882 = vpop.f32.mrf.mxu0
    %v883 = vadd.f32 %v818, %v882
    %884 = vdwg.mxu0
    %v885 = vadd.f32 %v513, %v862
    %v886 = vadd.f32 %v514, %v865
    %v887 = vadd.f32 %v515, %v868
    %v888 = vadd.f32 %v516, %v871
    %v889 = vmul.f32 %v885, %v57
    %v890 = vmul.f32 %v886, %v57
    %v891 = vmul.f32 %v887, %v57
    %v892 = vmul.f32 %v888, %v57
    %v893 = vadd.f32 %v517, %v874
    %v894 = vadd.f32 %v518, %v877
    %v895 = vadd.f32 %v519, %v880
    %v896 = vadd.f32 %v520, %v883
    %897 = vrot.lane.b32.xlu0 %v889, 4
    %v898 = vpop.permute.xlu0 %897
    %899 = vrot.lane.b32.xlu0 %v890, 4
    %v900 = vpop.permute.xlu0 %899
    %901 = vrot.lane.b32.xlu0 %v891, 4
    %v902 = vpop.permute.xlu0 %901
    %903 = vrot.lane.b32.xlu0 %v892, 4
    %v904 = vpop.permute.xlu0 %903
    %v905 = vadd.s32 %v60, 4294967292
    %vm906 = vcmp.ge.s32.totalorder %v905, 0
    %vm907 = vcmp.lt.s32.totalorder %v905, 64
    %vm908 = vmand %vm906, %vm907
    %v909 = vsel %vm908, 1.0, 0.0
    %v910 = vmul.f32 %v898, %v909
    %v911 = vmul.f32 %v900, %v909
    %v912 = vmul.f32 %v902, %v909
    %v913 = vmul.f32 %v904, %v909
    %914 = vrot.lane.b32.xlu0 %v889, 124
    %v915 = vpop.permute.xlu0 %914
    %916 = vrot.lane.b32.xlu0 %v890, 124
    %v917 = vpop.permute.xlu0 %916
    %918 = vrot.lane.b32.xlu0 %v891, 124
    %v919 = vpop.permute.xlu0 %918
    %920 = vrot.lane.b32.xlu0 %v892, 124
    %v921 = vpop.permute.xlu0 %920
    %v922 = vadd.s32 %v60, 4
    %vm923 = vcmp.ge.s32.totalorder %v922, 0
    %vm924 = vcmp.lt.s32.totalorder %v922, 64
    %vm925 = vmand %vm923, %vm924
    %v926 = vsel %vm925, 1.0, 0.0
    %v927 = vmul.f32 %v915, %v926
    %v928 = vmul.f32 %v917, %v926
    %v929 = vmul.f32 %v919, %v926
    %v930 = vmul.f32 %v921, %v926
    %s931 = scalar_lea.vmem %s4, 128
    %v932 = vld [vmem:[%s931] sm:$0xff]
    %v933 = vld [vmem:[%s931 + $0x8] sm:$0xff]
    %v934 = vld [vmem:[%s931 + $0x10] sm:$0xff]
    %v935 = vld [vmem:[%s931 + $0x18] sm:$0xff]
    %v936 = vld [vmem:[%s931 + $0x20] sm:$0xff]
    %v937 = vld [vmem:[%s931 + $0x28] sm:$0xff]
    %v938 = vld [vmem:[%s931 + $0x30] sm:$0xff]
    %v939 = vld [vmem:[%s931 + $0x38] sm:$0xff]
    %s940 = scalar_lea.vmem %s5, 128
    %v941 = vld [vmem:[%s940] sm:$0xff]
    %v942 = vld [vmem:[%s940 + $0x8] sm:$0xff]
    %v943 = vld [vmem:[%s940 + $0x10] sm:$0xff]
    %v944 = vld [vmem:[%s940 + $0x18] sm:$0xff]
    %v945 = vld [vmem:[%s940 + $0x20] sm:$0xff]
    %v946 = vld [vmem:[%s940 + $0x28] sm:$0xff]
    %v947 = vld [vmem:[%s940 + $0x30] sm:$0xff]
    %v948 = vld [vmem:[%s940 + $0x38] sm:$0xff]
    %950 = vset.pattern.permute.xlu0 0
    %951 = vperm.xlu0 %950, %v941
    %v952 = vpop.permute.xlu0 %951
    %955 = vset.pattern.permute.xlu0 0
    %956 = vperm.xlu0 %955, %v942
    %v957 = vpop.permute.xlu0 %956
    %960 = vset.pattern.permute.xlu0 0
    %961 = vperm.xlu0 %960, %v943
    %v962 = vpop.permute.xlu0 %961
    %965 = vset.pattern.permute.xlu0 0
    %966 = vperm.xlu0 %965, %v944
    %v967 = vpop.permute.xlu0 %966
    %970 = vset.pattern.permute.xlu0 0
    %971 = vperm.xlu0 %970, %v945
    %v972 = vpop.permute.xlu0 %971
    %975 = vset.pattern.permute.xlu0 0
    %976 = vperm.xlu0 %975, %v946
    %v977 = vpop.permute.xlu0 %976
    %980 = vset.pattern.permute.xlu0 0
    %981 = vperm.xlu0 %980, %v947
    %v982 = vpop.permute.xlu0 %981
    %985 = vset.pattern.permute.xlu0 0
    %986 = vperm.xlu0 %985, %v948
    %v987 = vpop.permute.xlu0 %986
    %v990 = vsel %vm237, %v932, 0
    %v993 = vsel %vm237, %v933, 0
    %v996 = vsel %vm237, %v934, 0
    %v999 = vsel %vm237, %v935, 0
    %v1002 = vsel %vm237, %v936, 0
    %v1005 = vsel %vm237, %v937, 0
    %v1008 = vsel %vm237, %v938, 0
    %v1011 = vsel %vm237, %v939, 0
    %1013 = vmatpush.msra.mxu0 0.0
    %1014 = vmatpush.msra.mxu0 0.0
    %1015 = vmatpush.msra.mxu0 0.0
    %1016 = vmatpush.msra.mxu0 0.0
    %1017 = vmatpush.msra.mxu0 %v930
    %1018 = vmatpush.msra.mxu0 %v929
    %1019 = vmatpush.msra.mxu0 %v928
    %1020 = vmatpush.msra.mxu0 %v927
    %1021 = vmatpush.msra.mxu0 %v892
    %1022 = vmatpush.msra.mxu0 %v891
    %1023 = vmatpush.msra.mxu0 %v890
    %1024 = vmatpush.msra.mxu0 %v889
    %1025 = vmatpush.msra.mxu0 %v913
    %1026 = vmatpush.msra.mxu0 %v912
    %1027 = vmatpush.msra.mxu0 %v911
    %1028 = vmatpush.msra.mxu0 %v910
    %1029 = vmatmul.f32.gmra.mxu0 %v990
    %v1030 = vpop.f32.mrf.mxu0
    %v1031 = vadd.f32 %v952, %v1030
    %1032 = vmatmul.f32.gmra.mxu0 %v993
    %v1033 = vpop.f32.mrf.mxu0
    %v1034 = vadd.f32 %v957, %v1033
    %1035 = vmatmul.f32.gmra.mxu0 %v996
    %v1036 = vpop.f32.mrf.mxu0
    %v1037 = vadd.f32 %v962, %v1036
    %1038 = vmatmul.f32.gmra.mxu0 %v999
    %v1039 = vpop.f32.mrf.mxu0
    %v1040 = vadd.f32 %v967, %v1039
    %1041 = vmatmul.f32.gmra.mxu0 %v1002
    %v1042 = vpop.f32.mrf.mxu0
    %v1043 = vadd.f32 %v972, %v1042
    %1044 = vmatmul.f32.gmra.mxu0 %v1005
    %v1045 = vpop.f32.mrf.mxu0
    %v1046 = vadd.f32 %v977, %v1045
    %1047 = vmatmul.f32.gmra.mxu0 %v1008
    %v1048 = vpop.f32.mrf.mxu0
    %v1049 = vadd.f32 %v982, %v1048
    %1050 = vmatmul.f32.gmra.mxu0 %v1011
    %v1051 = vpop.f32.mrf.mxu0
    %v1052 = vadd.f32 %v987, %v1051
    %1053 = vdwg.mxu0
    %v1054 = vtanh.pop %v1031
    %v1055 = vtanh.pop %v1034
    %v1056 = vtanh.pop %v1037
    %v1057 = vtanh.pop %v1040
    %v1058 = vxor.u32 %v1043, 2147483648
    %v1059 = vxor.u32 %v1046, 2147483648
    %v1060 = vxor.u32 %v1049, 2147483648
    %v1061 = vxor.u32 %v1052, 2147483648
    %v1062 = vmul.f32 %v1058, 1.442695
    %v1063 = vpow.pop %v1062
    %v1064 = vmul.f32 %v1059, 1.442695
    %v1065 = vpow.pop %v1064
    %v1066 = vmul.f32 %v1060, 1.442695
    %v1067 = vpow.pop %v1066
    %v1068 = vmul.f32 %v1061, 1.442695
    %v1069 = vpow.pop %v1068
    %v1070 = vadd.f32 %v1063, 1.0
    %v1071 = vadd.f32 %v1065, 1.0
    %v1072 = vadd.f32 %v1067, 1.0
    %v1073 = vadd.f32 %v1069, 1.0
    %v1074 = vrcp.pop %v1070
    %v1075 = vmul.f32 %v1070, %v1074
    %v1076 = vsub.f32 1.0, %v1075
    %v1077 = vmul.f32 %v1074, %v1076
    %v1078 = vadd.f32 %v1074, %v1077
    %vm1079 = vweird.f32 %v1070
    %vm1080 = vweird.f32 %v1074
    %vm1081 = vmor %vm1079, %vm1080
    %v1082 = vsel %vm1081, %v1074, %v1078
    %v1083 = vand.u32 2147483647, %v1070
    %vm1084 = vcmp.eq.f32.partialorder %v1083, 8.507059e+37
    %v1085 = vand.u32 %v1070, 2147483648
    %v1086 = vor.u32 1.1754944e-38, %v1085
    %v1087 = vsel %vm1084, %v1086, %v1082
    %v1088 = vmul.f32 1.0, %v1087
    %v1089 = vrcp.pop %v1071
    %v1090 = vmul.f32 %v1071, %v1089
    %v1091 = vsub.f32 1.0, %v1090
    %v1092 = vmul.f32 %v1089, %v1091
    %v1093 = vadd.f32 %v1089, %v1092
    %vm1094 = vweird.f32 %v1071
    %vm1095 = vweird.f32 %v1089
    %vm1096 = vmor %vm1094, %vm1095
    %v1097 = vsel %vm1096, %v1089, %v1093
    %v1098 = vand.u32 2147483647, %v1071
    %vm1099 = vcmp.eq.f32.partialorder %v1098, 8.507059e+37
    %v1100 = vand.u32 %v1071, 2147483648
    %v1101 = vor.u32 1.1754944e-38, %v1100
    %v1102 = vsel %vm1099, %v1101, %v1097
    %v1103 = vmul.f32 1.0, %v1102
    %v1104 = vrcp.pop %v1072
    %v1105 = vmul.f32 %v1072, %v1104
    %v1106 = vsub.f32 1.0, %v1105
    %v1107 = vmul.f32 %v1104, %v1106
    %v1108 = vadd.f32 %v1104, %v1107
    %vm1109 = vweird.f32 %v1072
    %vm1110 = vweird.f32 %v1104
    %vm1111 = vmor %vm1109, %vm1110
    %v1112 = vsel %vm1111, %v1104, %v1108
    %v1113 = vand.u32 2147483647, %v1072
    %vm1114 = vcmp.eq.f32.partialorder %v1113, 8.507059e+37
    %v1115 = vand.u32 %v1072, 2147483648
    %v1116 = vor.u32 1.1754944e-38, %v1115
    %v1117 = vsel %vm1114, %v1116, %v1112
    %v1118 = vmul.f32 1.0, %v1117
    %v1119 = vrcp.pop %v1073
    %v1120 = vmul.f32 %v1073, %v1119
    %v1121 = vsub.f32 1.0, %v1120
    %v1122 = vmul.f32 %v1119, %v1121
    %v1123 = vadd.f32 %v1119, %v1122
    %vm1124 = vweird.f32 %v1073
    %vm1125 = vweird.f32 %v1119
    %vm1126 = vmor %vm1124, %vm1125
    %v1127 = vsel %vm1126, %v1119, %v1123
    %v1128 = vand.u32 2147483647, %v1073
    %vm1129 = vcmp.eq.f32.partialorder %v1128, 8.507059e+37
    %v1130 = vand.u32 %v1073, 2147483648
    %v1131 = vor.u32 1.1754944e-38, %v1130
    %v1132 = vsel %vm1129, %v1131, %v1127
    %v1133 = vmul.f32 1.0, %v1132
    %v1134 = vmul.f32 %v1054, %v1088
    %v1135 = vmul.f32 %v1055, %v1103
    %v1136 = vmul.f32 %v1056, %v1118
    %v1137 = vmul.f32 %v1057, %v1133
    %s1138 = scalar_lea.vmem %s6, 128
    %v1139 = vld [vmem:[%s1138] sm:$0xff]
    %v1140 = vld [vmem:[%s1138 + $0x8] sm:$0xff]
    %v1141 = vld [vmem:[%s1138 + $0x10] sm:$0xff]
    %v1142 = vld [vmem:[%s1138 + $0x18] sm:$0xff]
    %v1143 = vld [vmem:[%s1138 + $0x20] sm:$0xff]
    %v1144 = vld [vmem:[%s1138 + $0x28] sm:$0xff]
    %v1145 = vld [vmem:[%s1138 + $0x30] sm:$0xff]
    %v1146 = vld [vmem:[%s1138 + $0x38] sm:$0xff]
    %s1147 = scalar_lea.vmem %s7, 128
    %v1148 = vld [vmem:[%s1147] sm:$0xff]
    %v1149 = vld [vmem:[%s1147 + $0x8] sm:$0xff]
    %v1150 = vld [vmem:[%s1147 + $0x10] sm:$0xff]
    %v1151 = vld [vmem:[%s1147 + $0x18] sm:$0xff]
    %v1152 = vld [vmem:[%s1147 + $0x20] sm:$0xff]
    %v1153 = vld [vmem:[%s1147 + $0x28] sm:$0xff]
    %v1154 = vld [vmem:[%s1147 + $0x30] sm:$0xff]
    %v1155 = vld [vmem:[%s1147 + $0x38] sm:$0xff]
    %1157 = vset.pattern.permute.xlu0 0
    %1158 = vperm.xlu0 %1157, %v1148
    %v1159 = vpop.permute.xlu0 %1158
    %1161 = vset.pattern.permute.xlu0 0
    %1162 = vperm.xlu0 %1161, %v1149
    %v1163 = vpop.permute.xlu0 %1162
    %1165 = vset.pattern.permute.xlu0 0
    %1166 = vperm.xlu0 %1165, %v1150
    %v1167 = vpop.permute.xlu0 %1166
    %1169 = vset.pattern.permute.xlu0 0
    %1170 = vperm.xlu0 %1169, %v1151
    %v1171 = vpop.permute.xlu0 %1170
    %1173 = vset.pattern.permute.xlu0 0
    %1174 = vperm.xlu0 %1173, %v1152
    %v1175 = vpop.permute.xlu0 %1174
    %1178 = vset.pattern.permute.xlu0 0
    %1179 = vperm.xlu0 %1178, %v1153
    %v1180 = vpop.permute.xlu0 %1179
    %1183 = vset.pattern.permute.xlu0 0
    %1184 = vperm.xlu0 %1183, %v1154
    %v1185 = vpop.permute.xlu0 %1184
    %1188 = vset.pattern.permute.xlu0 0
    %1189 = vperm.xlu0 %1188, %v1155
    %v1190 = vpop.permute.xlu0 %1189
    %v1193 = vsel %vm443, %v1139, 0
    %v1196 = vsel %vm443, %v1140, 0
    %v1199 = vsel %vm443, %v1141, 0
    %v1202 = vsel %vm443, %v1142, 0
    %v1205 = vsel %vm443, %v1143, 0
    %v1208 = vsel %vm443, %v1144, 0
    %v1211 = vsel %vm443, %v1145, 0
    %v1214 = vsel %vm443, %v1146, 0
    %1216 = vmatpush.msra.mxu0 0.0
    %1217 = vmatpush.msra.mxu0 0.0
    %1218 = vmatpush.msra.mxu0 0.0
    %1219 = vmatpush.msra.mxu0 0.0
    %1220 = vmatpush.msra.mxu0 0.0
    %1221 = vmatpush.msra.mxu0 0.0
    %1222 = vmatpush.msra.mxu0 0.0
    %1223 = vmatpush.msra.mxu0 0.0
    %1224 = vmatpush.msra.mxu0 0.0
    %1225 = vmatpush.msra.mxu0 0.0
    %1226 = vmatpush.msra.mxu0 0.0
    %1227 = vmatpush.msra.mxu0 0.0
    %1228 = vmatpush.msra.mxu0 %v1137
    %1229 = vmatpush.msra.mxu0 %v1136
    %1230 = vmatpush.msra.mxu0 %v1135
    %1231 = vmatpush.msra.mxu0 %v1134
    %1232 = vmatmul.f32.gmra.mxu0 %v1193
    %v1233 = vpop.f32.mrf.mxu0
    %1234 = vmatmul.f32.gmra.mxu0 %v1196
    %v1235 = vpop.f32.mrf.mxu0
    %1236 = vmatmul.f32.gmra.mxu0 %v1199
    %v1237 = vpop.f32.mrf.mxu0
    %1238 = vmatmul.f32.gmra.mxu0 %v1202
    %v1239 = vpop.f32.mrf.mxu0
    %1240 = vmatmul.f32.gmra.mxu0 %v1205
    %v1241 = vpop.f32.mrf.mxu0
    %v1242 = vadd.f32 %v1175, %v1241
    %1243 = vmatmul.f32.gmra.mxu0 %v1208
    %v1244 = vpop.f32.mrf.mxu0
    %v1245 = vadd.f32 %v1180, %v1244
    %1246 = vmatmul.f32.gmra.mxu0 %v1211
    %v1247 = vpop.f32.mrf.mxu0
    %v1248 = vadd.f32 %v1185, %v1247
    %1249 = vmatmul.f32.gmra.mxu0 %v1214
    %v1250 = vpop.f32.mrf.mxu0
    %v1251 = vadd.f32 %v1190, %v1250
    %1252 = vdwg.mxu0
    %v1253 = vadd.f32 %v893, %v1242
    %v1254 = vadd.f32 %v894, %v1245
    %v1255 = vadd.f32 %v895, %v1248
    %v1256 = vadd.f32 %v896, %v1251
    %v1257 = vmul.f32 %v1253, %v57
    %v1258 = vmul.f32 %v1254, %v57
    %v1259 = vmul.f32 %v1255, %v57
    %v1260 = vmul.f32 %v1256, %v57
    %v1261 = vld [vmem:[%s8] sm:$0xf]
    %v1262 = vld [vmem:[%s9] sm:$0xf]
    %1264 = vset.pattern.permute.xlu0 0
    %1265 = vperm.xlu0 %1264, %v1262
    %v1266 = vpop.permute.xlu0 %1265
    %v1269 = vsel %vm443, %v1261, 0
    %1271 = vmatpush.msra.mxu0 0.0
    %1272 = vmatpush.msra.mxu0 0.0
    %1273 = vmatpush.msra.mxu0 0.0
    %1274 = vmatpush.msra.mxu0 0.0
    %1275 = vmatpush.msra.mxu0 0.0
    %1276 = vmatpush.msra.mxu0 0.0
    %1277 = vmatpush.msra.mxu0 0.0
    %1278 = vmatpush.msra.mxu0 0.0
    %1279 = vmatpush.msra.mxu0 0.0
    %1280 = vmatpush.msra.mxu0 0.0
    %1281 = vmatpush.msra.mxu0 0.0
    %1282 = vmatpush.msra.mxu0 0.0
    %1283 = vmatpush.msra.mxu0 %v1260
    %1284 = vmatpush.msra.mxu0 %v1259
    %1285 = vmatpush.msra.mxu0 %v1258
    %1286 = vmatpush.msra.mxu0 %v1257
    %1287 = vmatmul.f32.gmra.mxu0 %v1269
    %v1288 = vpop.f32.mrf.mxu0
    %v1289 = vadd.f32 %v1266, %v1288
    %1290 = vdwg.mxu0
    %v1291 = vmul.f32 %v1289, %v57
    %v1292 = vmul.f32 %v1291, 1.442695
    %v1293 = vpow.pop %v1292
    %v1294 = vmul.f32 %v47, %v1293
    %v1295 = vmul.f32 %v1294, %v57
    %v1297 = vrot.slane %v1295, 2
    %v1299 = vadd.f32 %v1291, %v1297
    %v1301 = vrot.slane %v1299, 6
    %vm1303 = vcmask 1041408
    %v1304 = vsel %vm1303, %v47, %v1301
    %vm1305 = vcmask 519168
    %1306 = vst.msk [vmem:[#allocation2] sm:$0xf] %vm1305, %v1304
    %v1308 = vrot.slane %v1291, 2
    %vm1310 = vcmask 517120
    %v1311 = vsel %vm1310, %v1308, 0.0
    %1312 = vadd.xlane.f32.xlu0 %v1311
    %v1313 = vpop.xlane.xlu0 %1312
    %v1314 = vrot.slane %v1313, 4
    %v1315 = vadd.f32 %v1313, %v1314
    %v1316 = vrot.slane %v1315, 2
    %v1317 = vadd.f32 %v1315, %v1316
    %v1318 = vrot.slane %v1317, 1
    %v1319 = vadd.f32 %v1317, %v1318
    %s1320 = vtos %v1319
    %s1321 = scalar_lea.smem [#allocation5], 0
    %1322 = sst [smem:[%s1321]] %s1320
    %1324 = vrot.lane.b32.xlu0 %v1304, 64
    %v1325 = vpop.permute.xlu0 %1324
    %s1327 = scalar_lea.vmem [#allocation2], 4
    %1328 = vst.msk [vmem:[%s1327] sm:$0xf] %vm1305, %v1325
    %1329 = vrot.lane.b32.xlu0 %v1308, 64
    %v1330 = vpop.permute.xlu0 %1329
    %v1332 = vsel %vm1310, %v1330, 0.0
    %1333 = vadd.xlane.f32.xlu0 %v1332
    %v1334 = vpop.xlane.xlu0 %1333
    %v1335 = vrot.slane %v1334, 4
    %v1336 = vadd.f32 %v1334, %v1335
    %v1337 = vrot.slane %v1336, 2
    %v1338 = vadd.f32 %v1336, %v1337
    %v1339 = vrot.slane %v1338, 1
    %v1340 = vadd.f32 %v1338, %v1339
    %s1341 = vtos %v1340
    %s1342 = scalar_lea.smem [#allocation5], 1
    %1343 = sst [smem:[%s1342]] %s1341
    // Predicated region
    $region42: #{residual_coupling_forward.1} parent=1 // pred_check
      _
    $region43: #{residual_coupling_forward.1} parent=1 // pred_check_branch
      %1345 = sbr.rel (0) target = $region45
    $region44: #{residual_coupling_forward.1} parent=1 // pred_region
      %1347 = vsyncadd [#allocation3], 0
      %s1348 = sshll.u32 [#allocation2], 4
      %s1349 = int_to_ptr.vmem [resolvable:$true] %s1348
      %s1350 = sshll.u32 %s10, 4
      %s1351 = int_to_ptr.hbm [resolvable:$true] %s1350
      %1356 = dma.vmem_to_hbm [thread:$0]  %s1349, 128, %s1351, [#allocation3], 64, 64, 4
    $region45: #{residual_coupling_forward.1} parent=1 // pred_fallthru
      _
    // Predicated region
    $region46: #{residual_coupling_forward.1} parent=1 // pred_check
      _
    $region47: #{residual_coupling_forward.1} parent=1 // pred_check_branch
      %1358 = sbr.rel (0) target = $region49
    $region48: #{residual_coupling_forward.1} parent=1 // pred_region
      %1360 = vsyncadd [#allocation4], 0
      %s1362 = sshll.u32 %s11, 4
      %s1363 = int_to_ptr.hbm [resolvable:$true] %s1362
      %1365 = dma.smem_to_hbm [#allocation5], 16, %s1363, [#allocation4]
    $region49: #{residual_coupling_forward.1} parent=1 // pred_fallthru
      _
    // Predicated region
    $region50: #{residual_coupling_forward.1} parent=1 // pred_check
      _
    $region51: #{residual_coupling_forward.1} parent=1 // pred_check_branch
      %1367 = sbr.rel (0) target = $region53
    $region52: #{residual_coupling_forward.1} parent=1 // pred_region
      %1369 = dma.done [#allocation3], 128
    $region53: #{residual_coupling_forward.1} parent=1 // pred_fallthru
      _
    // Predicated region
    $region54: #{residual_coupling_forward.1} parent=1 // pred_check
      _
    $region55: #{residual_coupling_forward.1} parent=1 // pred_check_branch
      %1371 = sbr.rel (0) target = $region57
    $region56: #{residual_coupling_forward.1} parent=1 // pred_region
      %1373 = dma.done [#allocation4], 16
    $region57: #{residual_coupling_forward.1} parent=1 // pred_fallthru
      _
    %1374 = sfence
    %1375 = vsyncpa [#allocation3], 1
    %1376 = vsyncpa [#allocation4], 1

</llo_original>
